<compile_context>
chip_gen: v7x
topology: tpu7x:2x2x1
jax: 0.10.0
libtpu: 0.0.40
codegen_flags: <defaults>
</compile_context>

<pallas_src>
import functools

import jax
import jax.numpy as jnp
from jax.experimental import pallas as pl
from jax.experimental.pallas import tpu as pltpu

XI = 10.0
EPI = 6.0
IP = 1
EP = 1e-8          # Binary_dice_loss epsilon


# --------------------------- in-kernel helpers ---------------------------

def _conv_softmax_rows(x, w, b, approx):
    """1x1 conv (C->K) + softmax over classes in lane-dense layout.

    x: (C, P) voxels-on-lanes, w: (C, K), b: (K, 1).
    Returns a list of K rows, each (1, P) -- the class probabilities.
    The CxK contraction is K broadcast-multiplies + sublane reductions
    (VPU/XLU); no MXU, no weight transpose.  K == 2 uses the sigmoid form
    (one exp + one reciprocal) to halve EUP traffic.
    """
    kk = w.shape[1]
    logits = [jnp.sum(x * w[:, k:k + 1], axis=0, keepdims=True) + b[k:k + 1, :]
              for k in range(kk)]
    if kk == 2:
        # p1 = 1 / (1 + exp(l0 - l1)), p0 = 1 - p1 (overflow -> correct limit)
        denom = 1.0 + jnp.exp(logits[0] - logits[1])
        p1 = pl.reciprocal(denom, approx=True) if approx else 1.0 / denom
        return [1.0 - p1, p1]
    m = logits[0]
    for k in range(1, kk):
        m = jnp.maximum(m, logits[k])
    e = [jnp.exp(l - m) for l in logits]
    s = e[0]
    for k in range(1, kk):
        s = s + e[k]
    inv = pl.reciprocal(s, approx=True) if approx else 1.0 / s
    return [ek * inv for ek in e]


def _masked_dice_sums(p_rows, t_rows, mask):
    """(sum(p*t), sum(p*mask)) over all classes/voxels, each (1, 1).

    t_rows are already masked; sum(t) is constant and hoisted by the caller.
    """
    spt = sp = None
    for k in range(len(p_rows)):
        a = jnp.sum(p_rows[k] * t_rows[k], axis=1, keepdims=True)
        b = jnp.sum(p_rows[k] * mask, axis=1, keepdims=True)
        spt = a if spt is None else spt + a
        sp = b if sp is None else sp + b
    return spt, sp


# ------------------------------ fused kernel ------------------------------

def _vat_fused_kernel(x_ref, d_ref, w_ref, b_ref, xt_ref, wt_ref, bt_ref,
                      xe_ref, m_ref, lds_ref, d_sc,
                      *, xi, epi, ip, n_samples, samp):
    """One grid step = one head (grid=(2,), "parallel" -> v7x uses both TCs).

    Per head: target = softmax(other_conv(x_other)) [no_grad]; ip power
    iterations (perturb -> forward -> Binary dice -> analytic backward ->
    per-sample L2 normalize, d held in VMEM scratch); final masked dice term
    of this head written to its output block.
    """
    mask = m_ref[...]                     # (1, P): 1.0 real voxel / 0.0 pad
    w = w_ref[0]                          # (C, K) this head's out_conv weight
    b = b_ref[0]                          # (K, 1)
    kk = w.shape[1]

    # --- no_grad targets (exact reciprocal: they feed every dice term) ---
    t_rows = _conv_softmax_rows(xt_ref[0], wt_ref[0], bt_ref[0], approx=False)
    t_rows = [tr * mask for tr in t_rows]
    st = None                             # sum(target) -- constant, hoisted
    for k in range(kk):
        s = jnp.sum(t_rows[k], axis=1, keepdims=True)
        st = s if st is None else st + s

    d_sc[...] = d_ref[0]                  # initial random direction
    x = x_ref[0]

    # --- VAT power iteration (ip is a small static int; unrolled) ---
    for _ in range(ip):
        xp = x + xi * d_sc[...]           # perturb in-kernel
        p_rows = _conv_softmax_rows(xp, w, b, approx=True)

        # Binary_dice_loss: L = 1 - (2*sum(p*t)+ep) / (sum(p)+sum(t)+ep)
        spt, sp = _masked_dice_sums(p_rows, t_rows, mask)
        inter = 2.0 * spt + EP            # (1, 1)
        union = sp + st + EP              # (1, 1)
        inv_u = 1.0 / union
        a_c = 2.0 * inv_u
        b_c = inter * inv_u * inv_u
        # dL/dp_k = b_c - a_c * t_k  (zero on padded voxels)
        g_rows = [b_c * mask - a_c * t_rows[k] for k in range(kk)]

        # softmax backward: dlogits_k = p_k * (g_k - sum_j g_j p_j)
        inner = g_rows[0] * p_rows[0]
        for k in range(1, kk):
            inner = inner + g_rows[k] * p_rows[k]

        # 1x1-conv backward wrt input:  dL/dd_c ~ sum_k w[c,k] * dlogits_k
        # NOTE: the xi factor of the chain rule is dropped -- the direction is
        # immediately L2-normalized, so xi only enters via the +1e-8 eps.
        dx = None
        for k in range(kk):
            dlog_k = p_rows[k] * (g_rows[k] - inner)    # (1, P)
            term = w[:, k:k + 1] * dlog_k               # (C,1)*(1,P)->(C,P)
            dx = term if dx is None else dx + term

        # per-sample L2 normalization (== _l2_normalize); samples occupy
        # contiguous 128-aligned lane ranges -> unmasked aligned stores.
        for n in range(n_samples):
            lo = n * samp
            blk = dx[:, lo:lo + samp]
            nrm = jnp.sqrt(jnp.sum(jnp.sum(blk * blk, axis=1, keepdims=True),
                                   axis=0, keepdims=True))
            d_sc[:, lo:lo + samp] = blk * (1.0 / (nrm + 1e-8))

    # --- final adversarial dice term.  NOTE: the reference module evaluates
    #     BOTH heads on x[0] in the final pass -- reproduced faithfully, so
    #     xe_ref is x[0] for both grid steps.
    xpe = xe_ref[0] + epi * d_sc[...]
    p_rows = _conv_softmax_rows(xpe, w, b, approx=False)
    spt, sp = _masked_dice_sums(p_rows, t_rows, mask)
    l = 1.0 - (2.0 * spt + EP) / (sp + st + EP)         # (1, 1)
    lds_ref[...] = jnp.zeros(lds_ref.shape, jnp.float32) + l


# ------------------------------ JAX-side glue ------------------------------

def _to_lane_dense_padded(x):
    """(N, C, D, H, W) -> (C, N*samp) with samp = ceil(D*H*W/128)*128.

    Samples occupy contiguous, 128-aligned lane ranges; padded voxels are
    zero-filled and excluded from all sums via an in-kernel mask.
    """
    n, c = x.shape[0], x.shape[1]
    dhw = 1
    for s in x.shape[2:]:
        dhw *= s
    samp = ((dhw + 127) // 128) * 128
    xf = jnp.moveaxis(x, 1, 0).reshape(c, n, dhw)
    if samp != dhw:
        xf = jnp.pad(xf, ((0, 0), (0, 0), (0, samp - dhw)))
    return xf.reshape(c, n * samp), samp, dhw


def l2_normalize(d):
    """Matches _l2_normalize: per-sample L2 norm over all non-batch dims."""
    n = jnp.sqrt(jnp.sum(jnp.square(d.reshape(d.shape[0], -1)), axis=1))
    n = n.reshape((d.shape[0],) + (1,) * (d.ndim - 1))
    return d / (n + 1e-8)


def vat3d_v2_feat_forward(params, feats, key, xi=XI, epi=EPI, ip=IP):
    """params: [(w1 (C,K), b1 (K,)), (w2 (C,K), b2 (K,))] synthetic out_conv heads.
    feats: (x1, x2) decoder feature maps, each (N, C, D, H, W)."""
    (w1, b1), (w2, b2) = params
    x1, x2 = feats
    n, c = x1.shape[0], x1.shape[1]
    k = w1.shape[1]

    x1f, samp, dhw = _to_lane_dense_padded(x1)
    x2f, _, _ = _to_lane_dense_padded(x2)
    p = x1f.shape[1]

    # d = rand(x.shape) - 0.5, per-sample l2-normalized (as in the reference)
    k1, k2 = jax.random.split(key)
    d1 = l2_normalize(jax.random.uniform(k1, x1.shape, jnp.float32) - 0.5)
    d2 = l2_normalize(jax.random.uniform(k2, x2.shape, jnp.float32) - 0.5)
    d1f, _, _ = _to_lane_dense_padded(d1)
    d2f, _, _ = _to_lane_dense_padded(d2)

    # validity mask over padded lanes (all ones when D*H*W % 128 == 0)
    mask = jnp.tile((jnp.arange(samp) < dhw).astype(jnp.float32),
                    (n,)).reshape(1, p)

    # stack the two heads along a leading axis; cross-pairing via index maps
    xs = jnp.stack([x1f, x2f])                   # (2, C, P)
    ds = jnp.stack([d1f, d2f])                   # (2, C, P)
    ws = jnp.stack([w1, w2])                     # (2, C, K)
    bs = jnp.stack([b1.reshape(-1, 1), b2.reshape(-1, 1)])   # (2, K, 1)

    own = lambda h: (h, 0, 0)                    # this head's block
    oth = lambda h: (1 - h, 0, 0)                # the other head's block
    fst = lambda h: (0, 0, 0)                    # x[0] (module eval quirk)

    kern = functools.partial(_vat_fused_kernel, xi=xi, epi=epi, ip=ip,
                             n_samples=n, samp=samp)
    out = pl.pallas_call(
        kern,
        out_shape=jax.ShapeDtypeStruct((2, 8, 128), jnp.float32),
        grid_spec=pltpu.PrefetchScalarGridSpec(
            num_scalar_prefetch=0,
            grid=(2,),                           # one grid step per head
            in_specs=[pl.BlockSpec((1, c, p), own),      # x   (this head)
                      pl.BlockSpec((1, c, p), own),      # d0  (this head)
                      pl.BlockSpec((1, c, k), own),      # w   (this head)
                      pl.BlockSpec((1, k, 1), own),      # b   (this head)
                      pl.BlockSpec((1, c, p), oth),      # x   (other head -> target)
                      pl.BlockSpec((1, c, k), oth),      # w   (other head)
                      pl.BlockSpec((1, k, 1), oth),      # b   (other head)
                      pl.BlockSpec((1, c, p), fst),      # x[0] for final eval
                      pl.BlockSpec((1, p), lambda h: (0, 0))],  # pad mask
            out_specs=pl.BlockSpec((1, 8, 128), lambda h: (h, 0, 0)),
            scratch_shapes=[pltpu.VMEM((c, p), jnp.float32)]),   # d (per head)
        compiler_params=pltpu.CompilerParams(
            dimension_semantics=("parallel",)),  # v7x: one head per TC
    )(xs, ds, ws, bs, xs, ws, bs, xs, mask)

    # lds = dice(head1) + dice(head2): trivial JAX add of the two partials
    return out[0, 0, 0] + out[1, 0, 0]


# ------------------------------ main / reference ------------------------------

if __name__ == "__main__":
    key = jax.random.PRNGKey(0)
    kx1, kx2, kd, kw1, kw2, kb1, kb2 = jax.random.split(key, 7)

    N, C, D, H, W = 2, 16, 4, 8, 8      # two 3D decoder feature maps
    K = 2                                # binary segmentation head
    x1 = jax.random.normal(kx1, (N, C, D, H, W), dtype=jnp.float32)
    x2 = jax.random.normal(kx2, (N, C, D, H, W), dtype=jnp.float32)

    # deterministic synthetic model: two 1x1x1-conv out_conv heads (C -> K)
    params = [
        (0.5 * jax.random.normal(kw1, (C, K), dtype=jnp.float32),
         0.1 * jax.random.normal(kb1, (K,), dtype=jnp.float32)),
        (0.5 * jax.random.normal(kw2, (C, K), dtype=jnp.float32),
         0.1 * jax.random.normal(kb2, (K,), dtype=jnp.float32)),
    ]

    lds = jax.jit(vat3d_v2_feat_forward)(params, (x1, x2), kd)
    lds = jax.block_until_ready(lds)

    # pure-JAX reference (autodiff) sanity check of the fused Pallas kernel
    def ref_forward(p_list, feats, rkey, xi=XI, epi=EPI, ip=IP):
        (rw1, rb1), (rw2, rb2) = p_list
        rx1, rx2 = feats

        def out_conv(xin, w, b):
            return (jnp.einsum('ncdhw,ck->nkdhw', xin, w)
                    + b[None, :, None, None, None])

        def dice(pp, tt, ep=EP):
            inter = 2.0 * jnp.sum(pp * tt) + ep
            union = jnp.sum(pp) + jnp.sum(tt) + ep
            return 1.0 - inter / union

        pr1 = jax.nn.softmax(out_conv(rx1, rw1, rb1), axis=1)
        pr2 = jax.nn.softmax(out_conv(rx2, rw2, rb2), axis=1)

        rk1, rk2 = jax.random.split(rkey)
        dd1 = l2_normalize(jax.random.uniform(rk1, rx1.shape, jnp.float32) - 0.5)
        dd2 = l2_normalize(jax.random.uniform(rk2, rx2.shape, jnp.float32) - 0.5)

        for _ in range(ip):
            def adv(a1, a2):
                lp1 = jax.nn.softmax(out_conv(rx1 + xi * a1, rw1, rb1), axis=1)
                lp2 = jax.nn.softmax(out_conv(rx2 + xi * a2, rw2, rb2), axis=1)
                return dice(lp2, pr1) + dice(lp1, pr2)
            g1, g2 = jax.grad(adv, argnums=(0, 1))(dd1, dd2)
            dd1, dd2 = l2_normalize(g1), l2_normalize(g2)

        lp1 = jax.nn.softmax(out_conv(rx1 + epi * dd1, rw1, rb1), axis=1)
        # spec quirk: decoder2 is evaluated on x[0] in the original module
        lp2 = jax.nn.softmax(out_conv(rx1 + epi * dd2, rw2, rb2), axis=1)
        return dice(lp1, pr2) + dice(lp2, pr1)

    ref = jax.block_until_ready(ref_forward(params, (x1, x2), kd))
    # tolerance covers the approx EUP reciprocal inside the power step and the
    # dropped xi scale (eps-relative ~1e-9 effect)
    assert jnp.abs(lds - ref) < 1e-2, (float(lds), float(ref))

    print("KERNEL_OK")
</pallas_src>

<mosaic_0001>
module attributes {stable_mosaic.version = 11 : i64} {
  func.func @_vat_fused_kernel(%arg0: i32, %arg1: memref<1x16x512xf32, #tpu.memory_space<vmem>>, %arg2: memref<1x16x512xf32, #tpu.memory_space<vmem>>, %arg3: memref<1x16x2xf32, #tpu.memory_space<vmem>>, %arg4: memref<1x2x1xf32, #tpu.memory_space<vmem>>, %arg5: memref<1x16x512xf32, #tpu.memory_space<vmem>>, %arg6: memref<1x16x2xf32, #tpu.memory_space<vmem>>, %arg7: memref<1x2x1xf32, #tpu.memory_space<vmem>>, %arg8: memref<1x16x512xf32, #tpu.memory_space<vmem>>, %arg9: memref<1x512xf32, #tpu.memory_space<vmem>>, %arg10: memref<1x8x128xf32, #tpu.memory_space<vmem>>, %arg11: memref<16x512xf32, #tpu.memory_space<vmem>>) attributes {dimension_semantics = [#tpu.dimension_semantics<parallel>], iteration_bounds = array<i64: 2>, scalar_prefetch = 0 : i64, scratch_operands = 1 : i64, tpu.core_type = #tpu.core_type<tc>, window_params = [{transform_indices = @transform_0, window_bounds = array<i64: 1, 16, 512>}, {transform_indices = @transform_1, window_bounds = array<i64: 1, 16, 512>}, {transform_indices = @transform_2, window_bounds = array<i64: 1, 16, 2>}, {transform_indices = @transform_3, window_bounds = array<i64: 1, 2, 1>}, {transform_indices = @transform_4, window_bounds = array<i64: 1, 16, 512>}, {transform_indices = @transform_5, window_bounds = array<i64: 1, 16, 2>}, {transform_indices = @transform_6, window_bounds = array<i64: 1, 2, 1>}, {transform_indices = @transform_7, window_bounds = array<i64: 1, 16, 512>}, {pipeline_mode = #tpu.pipeline_mode<synchronous>, transform_indices = @transform_8, window_bounds = array<i64: 1, 512>}, {transform_indices = @transform_9, window_bounds = array<i64: 1, 8, 128>}]} {
    %c0 = arith.constant 0 : index
    %c0_0 = arith.constant 0 : index
    %0 = vector.load %arg9[%c0, %c0_0] : memref<1x512xf32, #tpu.memory_space<vmem>>, vector<1x512xf32>
    %c0_1 = arith.constant 0 : index
    %c0_2 = arith.constant 0 : index
    %c0_3 = arith.constant 0 : index
    %1 = vector.load %arg3[%c0_1, %c0_2, %c0_3] : memref<1x16x2xf32, #tpu.memory_space<vmem>>, vector<1x16x2xf32>
    %2 = vector.shape_cast %1 : vector<1x16x2xf32> to vector<16x2xf32>
    %c0_4 = arith.constant 0 : index
    %c0_5 = arith.constant 0 : index
    %c0_6 = arith.constant 0 : index
    %3 = vector.load %arg4[%c0_4, %c0_5, %c0_6] : memref<1x2x1xf32, #tpu.memory_space<vmem>>, vector<1x2x1xf32>
    %4 = vector.shape_cast %3 : vector<1x2x1xf32> to vector<2x1xf32>
    %c0_7 = arith.constant 0 : index
    %c0_8 = arith.constant 0 : index
    %c0_9 = arith.constant 0 : index
    %5 = vector.load %arg5[%c0_7, %c0_8, %c0_9] : memref<1x16x512xf32, #tpu.memory_space<vmem>>, vector<1x16x512xf32>
    %6 = vector.shape_cast %5 : vector<1x16x512xf32> to vector<16x512xf32>
    %c0_10 = arith.constant 0 : index
    %c0_11 = arith.constant 0 : index
    %c0_12 = arith.constant 0 : index
    %7 = vector.load %arg6[%c0_10, %c0_11, %c0_12] : memref<1x16x2xf32, #tpu.memory_space<vmem>>, vector<1x16x2xf32>
    %8 = vector.shape_cast %7 : vector<1x16x2xf32> to vector<16x2xf32>
    %c0_13 = arith.constant 0 : index
    %c0_14 = arith.constant 0 : index
    %c0_15 = arith.constant 0 : index
    %9 = vector.load %arg7[%c0_13, %c0_14, %c0_15] : memref<1x2x1xf32, #tpu.memory_space<vmem>>, vector<1x2x1xf32>
    %10 = vector.shape_cast %9 : vector<1x2x1xf32> to vector<2x1xf32>
    %11 = vector.extract_strided_slice %8 {offsets = [0, 0], sizes = [16, 1], strides = [1, 1]} : vector<16x2xf32> to vector<16x1xf32>
    %12 = vector.broadcast %11 : vector<16x1xf32> to vector<16x512xf32>
    %13 = arith.mulf %6, %12 : vector<16x512xf32>
    %cst = arith.constant dense<0.000000e+00> : vector<512xf32>
    %14 = vector.multi_reduction <add>, %13, %cst [0] : vector<16x512xf32> to vector<512xf32>
    %15 = vector.shape_cast %14 : vector<512xf32> to vector<1x512xf32>
    %16 = vector.extract_strided_slice %10 {offsets = [0, 0], sizes = [1, 1], strides = [1, 1]} : vector<2x1xf32> to vector<1x1xf32>
    %17 = vector.broadcast %16 : vector<1x1xf32> to vector<1x512xf32>
    %18 = arith.addf %15, %17 : vector<1x512xf32>
    %19 = vector.extract_strided_slice %8 {offsets = [0, 1], sizes = [16, 1], strides = [1, 1]} : vector<16x2xf32> to vector<16x1xf32>
    %20 = vector.broadcast %19 : vector<16x1xf32> to vector<16x512xf32>
    %21 = arith.mulf %6, %20 : vector<16x512xf32>
    %cst_16 = arith.constant dense<0.000000e+00> : vector<512xf32>
    %22 = vector.multi_reduction <add>, %21, %cst_16 [0] : vector<16x512xf32> to vector<512xf32>
    %23 = vector.shape_cast %22 : vector<512xf32> to vector<1x512xf32>
    %24 = vector.extract_strided_slice %10 {offsets = [1, 0], sizes = [1, 1], strides = [1, 1]} : vector<2x1xf32> to vector<1x1xf32>
    %25 = vector.broadcast %24 : vector<1x1xf32> to vector<1x512xf32>
    %26 = arith.addf %23, %25 : vector<1x512xf32>
    %27 = arith.subf %18, %26 : vector<1x512xf32>
    %28 = math.exp %27 : vector<1x512xf32>
    %cst_17 = arith.constant 1.000000e+00 : f32
    %29 = vector.broadcast %cst_17 : f32 to vector<1x512xf32>
    %30 = arith.addf %29, %28 : vector<1x512xf32>
    %cst_18 = arith.constant 1.000000e+00 : f32
    %31 = vector.broadcast %cst_18 : f32 to vector<1x512xf32>
    %32 = arith.divf %31, %30 : vector<1x512xf32>
    %cst_19 = arith.constant 1.000000e+00 : f32
    %33 = vector.broadcast %cst_19 : f32 to vector<1x512xf32>
    %34 = arith.subf %33, %32 : vector<1x512xf32>
    %35 = arith.mulf %34, %0 : vector<1x512xf32>
    %36 = arith.mulf %32, %0 : vector<1x512xf32>
    %cst_20 = arith.constant dense<0.000000e+00> : vector<1xf32>
    %37 = vector.multi_reduction <add>, %35, %cst_20 [1] : vector<1x512xf32> to vector<1xf32>
    %38 = vector.shape_cast %37 : vector<1xf32> to vector<1x1xf32>
    %cst_21 = arith.constant dense<0.000000e+00> : vector<1xf32>
    %39 = vector.multi_reduction <add>, %36, %cst_21 [1] : vector<1x512xf32> to vector<1xf32>
    %40 = vector.shape_cast %39 : vector<1xf32> to vector<1x1xf32>
    %41 = arith.addf %38, %40 : vector<1x1xf32>
    %c0_22 = arith.constant 0 : index
    %c0_23 = arith.constant 0 : index
    %c0_24 = arith.constant 0 : index
    %42 = vector.load %arg2[%c0_22, %c0_23, %c0_24] : memref<1x16x512xf32, #tpu.memory_space<vmem>>, vector<1x16x512xf32>
    %43 = vector.shape_cast %42 : vector<1x16x512xf32> to vector<16x512xf32>
    %c0_25 = arith.constant 0 : index
    %c0_26 = arith.constant 0 : index
    %44 = vector.load %arg11[%c0_25, %c0_26] : memref<16x512xf32, #tpu.memory_space<vmem>>, vector<16x512xf32>
    tpu.vector_store %arg11[%c0_25, %c0_26], %43 {strides = array<i32>} : memref<16x512xf32, #tpu.memory_space<vmem>>, vector<16x512xf32>,
    %c0_27 = arith.constant 0 : index
    %c0_28 = arith.constant 0 : index
    %c0_29 = arith.constant 0 : index
    %45 = vector.load %arg1[%c0_27, %c0_28, %c0_29] : memref<1x16x512xf32, #tpu.memory_space<vmem>>, vector<1x16x512xf32>
    %46 = vector.shape_cast %45 : vector<1x16x512xf32> to vector<16x512xf32>
    %c0_30 = arith.constant 0 : index
    %c0_31 = arith.constant 0 : index
    %47 = vector.load %arg11[%c0_30, %c0_31] : memref<16x512xf32, #tpu.memory_space<vmem>>, vector<16x512xf32>
    %cst_32 = arith.constant 1.000000e+01 : f32
    %48 = vector.broadcast %cst_32 : f32 to vector<16x512xf32>
    %49 = arith.mulf %48, %47 : vector<16x512xf32>
    %50 = arith.addf %46, %49 : vector<16x512xf32>
    %51 = vector.extract_strided_slice %2 {offsets = [0, 0], sizes = [16, 1], strides = [1, 1]} : vector<16x2xf32> to vector<16x1xf32>
    %52 = vector.broadcast %51 : vector<16x1xf32> to vector<16x512xf32>
    %53 = arith.mulf %50, %52 : vector<16x512xf32>
    %cst_33 = arith.constant dense<0.000000e+00> : vector<512xf32>
    %54 = vector.multi_reduction <add>, %53, %cst_33 [0] : vector<16x512xf32> to vector<512xf32>
    %55 = vector.shape_cast %54 : vector<512xf32> to vector<1x512xf32>
    %56 = vector.extract_strided_slice %4 {offsets = [0, 0], sizes = [1, 1], strides = [1, 1]} : vector<2x1xf32> to vector<1x1xf32>
    %57 = vector.broadcast %56 : vector<1x1xf32> to vector<1x512xf32>
    %58 = arith.addf %55, %57 : vector<1x512xf32>
    %59 = vector.extract_strided_slice %2 {offsets = [0, 1], sizes = [16, 1], strides = [1, 1]} : vector<16x2xf32> to vector<16x1xf32>
    %60 = vector.broadcast %59 : vector<16x1xf32> to vector<16x512xf32>
    %61 = arith.mulf %50, %60 : vector<16x512xf32>
    %cst_34 = arith.constant dense<0.000000e+00> : vector<512xf32>
    %62 = vector.multi_reduction <add>, %61, %cst_34 [0] : vector<16x512xf32> to vector<512xf32>
    %63 = vector.shape_cast %62 : vector<512xf32> to vector<1x512xf32>
    %64 = vector.extract_strided_slice %4 {offsets = [1, 0], sizes = [1, 1], strides = [1, 1]} : vector<2x1xf32> to vector<1x1xf32>
    %65 = vector.broadcast %64 : vector<1x1xf32> to vector<1x512xf32>
    %66 = arith.addf %63, %65 : vector<1x512xf32>
    %67 = arith.subf %58, %66 : vector<1x512xf32>
    %68 = math.exp %67 : vector<1x512xf32>
    %cst_35 = arith.constant 1.000000e+00 : f32
    %69 = vector.broadcast %cst_35 : f32 to vector<1x512xf32>
    %70 = arith.addf %69, %68 : vector<1x512xf32>
    %71 = tpu.reciprocal %70 {approx = true} : vector<1x512xf32> -> vector<1x512xf32>
    %cst_36 = arith.constant 1.000000e+00 : f32
    %72 = vector.broadcast %cst_36 : f32 to vector<1x512xf32>
    %73 = arith.subf %72, %71 : vector<1x512xf32>
    %74 = arith.mulf %73, %35 : vector<1x512xf32>
    %cst_37 = arith.constant dense<0.000000e+00> : vector<1xf32>
    %75 = vector.multi_reduction <add>, %74, %cst_37 [1] : vector<1x512xf32> to vector<1xf32>
    %76 = vector.shape_cast %75 : vector<1xf32> to vector<1x1xf32>
    %77 = arith.mulf %73, %0 : vector<1x512xf32>
    %cst_38 = arith.constant dense<0.000000e+00> : vector<1xf32>
    %78 = vector.multi_reduction <add>, %77, %cst_38 [1] : vector<1x512xf32> to vector<1xf32>
    %79 = vector.shape_cast %78 : vector<1xf32> to vector<1x1xf32>
    %80 = arith.mulf %71, %36 : vector<1x512xf32>
    %cst_39 = arith.constant dense<0.000000e+00> : vector<1xf32>
    %81 = vector.multi_reduction <add>, %80, %cst_39 [1] : vector<1x512xf32> to vector<1xf32>
    %82 = vector.shape_cast %81 : vector<1xf32> to vector<1x1xf32>
    %83 = arith.mulf %71, %0 : vector<1x512xf32>
    %cst_40 = arith.constant dense<0.000000e+00> : vector<1xf32>
    %84 = vector.multi_reduction <add>, %83, %cst_40 [1] : vector<1x512xf32> to vector<1xf32>
    %85 = vector.shape_cast %84 : vector<1xf32> to vector<1x1xf32>
    %86 = arith.addf %76, %82 : vector<1x1xf32>
    %87 = arith.addf %79, %85 : vector<1x1xf32>
    %cst_41 = arith.constant 2.000000e+00 : f32
    %88 = vector.broadcast %cst_41 : f32 to vector<1x1xf32>
    %89 = arith.mulf %88, %86 : vector<1x1xf32>
    %cst_42 = arith.constant 9.99999993E-9 : f32
    %90 = vector.broadcast %cst_42 : f32 to vector<1x1xf32>
    %91 = arith.addf %89, %90 : vector<1x1xf32>
    %92 = arith.addf %87, %41 : vector<1x1xf32>
    %cst_43 = arith.constant 9.99999993E-9 : f32
    %93 = vector.broadcast %cst_43 : f32 to vector<1x1xf32>
    %94 = arith.addf %92, %93 : vector<1x1xf32>
    %cst_44 = arith.constant 1.000000e+00 : f32
    %95 = vector.broadcast %cst_44 : f32 to vector<1x1xf32>
    %96 = arith.divf %95, %94 : vector<1x1xf32>
    %cst_45 = arith.constant 2.000000e+00 : f32
    %97 = vector.broadcast %cst_45 : f32 to vector<1x1xf32>
    %98 = arith.mulf %97, %96 : vector<1x1xf32>
    %99 = arith.mulf %91, %96 : vector<1x1xf32>
    %100 = arith.mulf %99, %96 : vector<1x1xf32>
    %101 = vector.broadcast %100 : vector<1x1xf32> to vector<1x512xf32>
    %102 = arith.mulf %101, %0 : vector<1x512xf32>
    %103 = vector.broadcast %98 : vector<1x1xf32> to vector<1x512xf32>
    %104 = arith.mulf %103, %35 : vector<1x512xf32>
    %105 = arith.subf %102, %104 : vector<1x512xf32>
    %106 = vector.broadcast %100 : vector<1x1xf32> to vector<1x512xf32>
    %107 = arith.mulf %106, %0 : vector<1x512xf32>
    %108 = vector.broadcast %98 : vector<1x1xf32> to vector<1x512xf32>
    %109 = arith.mulf %108, %36 : vector<1x512xf32>
    %110 = arith.subf %107, %109 : vector<1x512xf32>
    %111 = arith.mulf %105, %73 : vector<1x512xf32>
    %112 = arith.mulf %110, %71 : vector<1x512xf32>
    %113 = arith.addf %111, %112 : vector<1x512xf32>
    %114 = arith.subf %105, %113 : vector<1x512xf32>
    %115 = arith.mulf %73, %114 : vector<1x512xf32>
    %116 = vector.extract_strided_slice %2 {offsets = [0, 0], sizes = [16, 1], strides = [1, 1]} : vector<16x2xf32> to vector<16x1xf32>
    %117 = vector.broadcast %116 : vector<16x1xf32> to vector<16x512xf32>
    %118 = vector.broadcast %115 : vector<1x512xf32> to vector<16x512xf32>
    %119 = arith.mulf %117, %118 : vector<16x512xf32>
    %120 = arith.subf %110, %113 : vector<1x512xf32>
    %121 = arith.mulf %71, %120 : vector<1x512xf32>
    %122 = vector.extract_strided_slice %2 {offsets = [0, 1], sizes = [16, 1], strides = [1, 1]} : vector<16x2xf32> to vector<16x1xf32>
    %123 = vector.broadcast %122 : vector<16x1xf32> to vector<16x512xf32>
    %124 = vector.broadcast %121 : vector<1x512xf32> to vector<16x512xf32>
    %125 = arith.mulf %123, %124 : vector<16x512xf32>
    %126 = arith.addf %119, %125 : vector<16x512xf32>
    %127 = vector.extract_strided_slice %126 {offsets = [0, 0], sizes = [16, 256], strides = [1, 1]} : vector<16x512xf32> to vector<16x256xf32>
    %128 = arith.mulf %127, %127 : vector<16x256xf32>
    %cst_46 = arith.constant dense<0.000000e+00> : vector<16xf32>
    %129 = vector.multi_reduction <add>, %128, %cst_46 [1] : vector<16x256xf32> to vector<16xf32>
    %130 = vector.shape_cast %129 : vector<16xf32> to vector<16x1xf32>
    %cst_47 = arith.constant dense<0.000000e+00> : vector<1xf32>
    %131 = vector.multi_reduction <add>, %130, %cst_47 [0] : vector<16x1xf32> to vector<1xf32>
    %132 = vector.shape_cast %131 : vector<1xf32> to vector<1x1xf32>
    %133 = math.sqrt %132 : vector<1x1xf32>
    %cst_48 = arith.constant 9.99999993E-9 : f32
    %134 = vector.broadcast %cst_48 : f32 to vector<1x1xf32>
    %135 = arith.addf %133, %134 : vector<1x1xf32>
    %cst_49 = arith.constant 1.000000e+00 : f32
    %136 = vector.broadcast %cst_49 : f32 to vector<1x1xf32>
    %137 = arith.divf %136, %135 : vector<1x1xf32>
    %138 = vector.broadcast %137 : vector<1x1xf32> to vector<16x256xf32>
    %139 = arith.mulf %127, %138 : vector<16x256xf32>
    %c0_50 = arith.constant 0 : index
    %c0_51 = arith.constant 0 : index
    %140 = vector.load %arg11[%c0_50, %c0_51] : memref<16x512xf32, #tpu.memory_space<vmem>>, vector<16x256xf32>
    tpu.vector_store %arg11[%c0_50, %c0_51], %139 {strides = array<i32>} : memref<16x512xf32, #tpu.memory_space<vmem>>, vector<16x256xf32>,
    %141 = vector.extract_strided_slice %126 {offsets = [0, 256], sizes = [16, 256], strides = [1, 1]} : vector<16x512xf32> to vector<16x256xf32>
    %142 = arith.mulf %141, %141 : vector<16x256xf32>
    %cst_52 = arith.constant dense<0.000000e+00> : vector<16xf32>
    %143 = vector.multi_reduction <add>, %142, %cst_52 [1] : vector<16x256xf32> to vector<16xf32>
    %144 = vector.shape_cast %143 : vector<16xf32> to vector<16x1xf32>
    %cst_53 = arith.constant dense<0.000000e+00> : vector<1xf32>
    %145 = vector.multi_reduction <add>, %144, %cst_53 [0] : vector<16x1xf32> to vector<1xf32>
    %146 = vector.shape_cast %145 : vector<1xf32> to vector<1x1xf32>
    %147 = math.sqrt %146 : vector<1x1xf32>
    %cst_54 = arith.constant 9.99999993E-9 : f32
    %148 = vector.broadcast %cst_54 : f32 to vector<1x1xf32>
    %149 = arith.addf %147, %148 : vector<1x1xf32>
    %cst_55 = arith.constant 1.000000e+00 : f32
    %150 = vector.broadcast %cst_55 : f32 to vector<1x1xf32>
    %151 = arith.divf %150, %149 : vector<1x1xf32>
    %152 = vector.broadcast %151 : vector<1x1xf32> to vector<16x256xf32>
    %153 = arith.mulf %141, %152 : vector<16x256xf32>
    %c0_56 = arith.constant 0 : index
    %c256 = arith.constant 256 : index
    %154 = vector.load %arg11[%c0_56, %c256] : memref<16x512xf32, #tpu.memory_space<vmem>>, vector<16x256xf32>
    tpu.vector_store %arg11[%c0_56, %c256], %153 {strides = array<i32>} : memref<16x512xf32, #tpu.memory_space<vmem>>, vector<16x256xf32>,
    %c0_57 = arith.constant 0 : index
    %c0_58 = arith.constant 0 : index
    %c0_59 = arith.constant 0 : index
    %155 = vector.load %arg8[%c0_57, %c0_58, %c0_59] : memref<1x16x512xf32, #tpu.memory_space<vmem>>, vector<1x16x512xf32>
    %156 = vector.shape_cast %155 : vector<1x16x512xf32> to vector<16x512xf32>
    %c0_60 = arith.constant 0 : index
    %c0_61 = arith.constant 0 : index
    %157 = vector.load %arg11[%c0_60, %c0_61] : memref<16x512xf32, #tpu.memory_space<vmem>>, vector<16x512xf32>
    %cst_62 = arith.constant 6.000000e+00 : f32
    %158 = vector.broadcast %cst_62 : f32 to vector<16x512xf32>
    %159 = arith.mulf %158, %157 : vector<16x512xf32>
    %160 = arith.addf %156, %159 : vector<16x512xf32>
    %161 = vector.extract_strided_slice %2 {offsets = [0, 0], sizes = [16, 1], strides = [1, 1]} : vector<16x2xf32> to vector<16x1xf32>
    %162 = vector.broadcast %161 : vector<16x1xf32> to vector<16x512xf32>
    %163 = arith.mulf %160, %162 : vector<16x512xf32>
    %cst_63 = arith.constant dense<0.000000e+00> : vector<512xf32>
    %164 = vector.multi_reduction <add>, %163, %cst_63 [0] : vector<16x512xf32> to vector<512xf32>
    %165 = vector.shape_cast %164 : vector<512xf32> to vector<1x512xf32>
    %166 = vector.extract_strided_slice %4 {offsets = [0, 0], sizes = [1, 1], strides = [1, 1]} : vector<2x1xf32> to vector<1x1xf32>
    %167 = vector.broadcast %166 : vector<1x1xf32> to vector<1x512xf32>
    %168 = arith.addf %165, %167 : vector<1x512xf32>
    %169 = vector.extract_strided_slice %2 {offsets = [0, 1], sizes = [16, 1], strides = [1, 1]} : vector<16x2xf32> to vector<16x1xf32>
    %170 = vector.broadcast %169 : vector<16x1xf32> to vector<16x512xf32>
    %171 = arith.mulf %160, %170 : vector<16x512xf32>
    %cst_64 = arith.constant dense<0.000000e+00> : vector<512xf32>
    %172 = vector.multi_reduction <add>, %171, %cst_64 [0] : vector<16x512xf32> to vector<512xf32>
    %173 = vector.shape_cast %172 : vector<512xf32> to vector<1x512xf32>
    %174 = vector.extract_strided_slice %4 {offsets = [1, 0], sizes = [1, 1], strides = [1, 1]} : vector<2x1xf32> to vector<1x1xf32>
    %175 = vector.broadcast %174 : vector<1x1xf32> to vector<1x512xf32>
    %176 = arith.addf %173, %175 : vector<1x512xf32>
    %177 = arith.subf %168, %176 : vector<1x512xf32>
    %178 = math.exp %177 : vector<1x512xf32>
    %cst_65 = arith.constant 1.000000e+00 : f32
    %179 = vector.broadcast %cst_65 : f32 to vector<1x512xf32>
    %180 = arith.addf %179, %178 : vector<1x512xf32>
    %cst_66 = arith.constant 1.000000e+00 : f32
    %181 = vector.broadcast %cst_66 : f32 to vector<1x512xf32>
    %182 = arith.divf %181, %180 : vector<1x512xf32>
    %cst_67 = arith.constant 1.000000e+00 : f32
    %183 = vector.broadcast %cst_67 : f32 to vector<1x512xf32>
    %184 = arith.subf %183, %182 : vector<1x512xf32>
    %185 = arith.mulf %184, %35 : vector<1x512xf32>
    %cst_68 = arith.constant dense<0.000000e+00> : vector<1xf32>
    %186 = vector.multi_reduction <add>, %185, %cst_68 [1] : vector<1x512xf32> to vector<1xf32>
    %187 = vector.shape_cast %186 : vector<1xf32> to vector<1x1xf32>
    %188 = arith.mulf %184, %0 : vector<1x512xf32>
    %cst_69 = arith.constant dense<0.000000e+00> : vector<1xf32>
    %189 = vector.multi_reduction <add>, %188, %cst_69 [1] : vector<1x512xf32> to vector<1xf32>
    %190 = vector.shape_cast %189 : vector<1xf32> to vector<1x1xf32>
    %191 = arith.mulf %182, %36 : vector<1x512xf32>
    %cst_70 = arith.constant dense<0.000000e+00> : vector<1xf32>
    %192 = vector.multi_reduction <add>, %191, %cst_70 [1] : vector<1x512xf32> to vector<1xf32>
    %193 = vector.shape_cast %192 : vector<1xf32> to vector<1x1xf32>
    %194 = arith.mulf %182, %0 : vector<1x512xf32>
    %cst_71 = arith.constant dense<0.000000e+00> : vector<1xf32>
    %195 = vector.multi_reduction <add>, %194, %cst_71 [1] : vector<1x512xf32> to vector<1xf32>
    %196 = vector.shape_cast %195 : vector<1xf32> to vector<1x1xf32>
    %197 = arith.addf %187, %193 : vector<1x1xf32>
    %198 = arith.addf %190, %196 : vector<1x1xf32>
    %cst_72 = arith.constant 2.000000e+00 : f32
    %199 = vector.broadcast %cst_72 : f32 to vector<1x1xf32>
    %200 = arith.mulf %199, %197 : vector<1x1xf32>
    %cst_73 = arith.constant 9.99999993E-9 : f32
    %201 = vector.broadcast %cst_73 : f32 to vector<1x1xf32>
    %202 = arith.addf %200, %201 : vector<1x1xf32>
    %203 = arith.addf %198, %41 : vector<1x1xf32>
    %cst_74 = arith.constant 9.99999993E-9 : f32
    %204 = vector.broadcast %cst_74 : f32 to vector<1x1xf32>
    %205 = arith.addf %203, %204 : vector<1x1xf32>
    %206 = arith.divf %202, %205 : vector<1x1xf32>
    %cst_75 = arith.constant 1.000000e+00 : f32
    %207 = vector.broadcast %cst_75 : f32 to vector<1x1xf32>
    %208 = arith.subf %207, %206 : vector<1x1xf32>
    %cst_76 = arith.constant 0.000000e+00 : f32
    %209 = vector.broadcast %cst_76 : f32 to vector<1x8x128xf32>
    %210 = vector.shape_cast %208 : vector<1x1xf32> to vector<1x1x1xf32>
    %211 = vector.broadcast %210 : vector<1x1x1xf32> to vector<1x8x128xf32>
    %212 = arith.addf %209, %211 : vector<1x8x128xf32>
    %c0_77 = arith.constant 0 : index
    %c0_78 = arith.constant 0 : index
    %c0_79 = arith.constant 0 : index
    %213 = vector.load %arg10[%c0_77, %c0_78, %c0_79] : memref<1x8x128xf32, #tpu.memory_space<vmem>>, vector<1x8x128xf32>
    tpu.vector_store %arg10[%c0_77, %c0_78, %c0_79], %212 {strides = array<i32>} : memref<1x8x128xf32, #tpu.memory_space<vmem>>, vector<1x8x128xf32>,
    return
  }
  func.func @transform_0(%arg0: i32) -> (i32, i32, i32) {
    %c0_i32 = arith.constant 0 : i32
    %c0_i32_0 = arith.constant 0 : i32
    %c0_i32_1 = arith.constant 0 : i32
    return %arg0, %c0_i32, %c0_i32_0 : i32, i32, i32
  }
  func.func @transform_1(%arg0: i32) -> (i32, i32, i32) {
    %c0_i32 = arith.constant 0 : i32
    %c0_i32_0 = arith.constant 0 : i32
    %c0_i32_1 = arith.constant 0 : i32
    return %arg0, %c0_i32, %c0_i32_0 : i32, i32, i32
  }
  func.func @transform_2(%arg0: i32) -> (i32, i32, i32) {
    %c0_i32 = arith.constant 0 : i32
    %c0_i32_0 = arith.constant 0 : i32
    %c0_i32_1 = arith.constant 0 : i32
    return %arg0, %c0_i32, %c0_i32_0 : i32, i32, i32
  }
  func.func @transform_3(%arg0: i32) -> (i32, i32, i32) {
    %c0_i32 = arith.constant 0 : i32
    %c0_i32_0 = arith.constant 0 : i32
    %c0_i32_1 = arith.constant 0 : i32
    return %arg0, %c0_i32, %c0_i32_0 : i32, i32, i32
  }
  func.func @transform_4(%arg0: i32) -> (i32, i32, i32) {
    %c1_i32 = arith.constant 1 : i32
    %0 = arith.subi %c1_i32, %arg0 : i32
    %c0_i32 = arith.constant 0 : i32
    %c0_i32_0 = arith.constant 0 : i32
    %c0_i32_1 = arith.constant 0 : i32
    return %0, %c0_i32, %c0_i32_0 : i32, i32, i32
  }
  func.func @transform_5(%arg0: i32) -> (i32, i32, i32) {
    %c1_i32 = arith.constant 1 : i32
    %0 = arith.subi %c1_i32, %arg0 : i32
    %c0_i32 = arith.constant 0 : i32
    %c0_i32_0 = arith.constant 0 : i32
    %c0_i32_1 = arith.constant 0 : i32
    return %0, %c0_i32, %c0_i32_0 : i32, i32, i32
  }
  func.func @transform_6(%arg0: i32) -> (i32, i32, i32) {
    %c1_i32 = arith.constant 1 : i32
    %0 = arith.subi %c1_i32, %arg0 : i32
    %c0_i32 = arith.constant 0 : i32
    %c0_i32_0 = arith.constant 0 : i32
    %c0_i32_1 = arith.constant 0 : i32
    return %0, %c0_i32, %c0_i32_0 : i32, i32, i32
  }
  func.func @transform_7(%arg0: i32) -> (i32, i32, i32) {
    %c0_i32 = arith.constant 0 : i32
    %c0_i32_0 = arith.constant 0 : i32
    %c0_i32_1 = arith.constant 0 : i32
    %c0_i32_2 = arith.constant 0 : i32
    return %c0_i32, %c0_i32_0, %c0_i32_1 : i32, i32, i32
  }
  func.func @transform_8(%arg0: i32) -> (i32, i32) {
    %c0_i32 = arith.constant 0 : i32
    %c0_i32_0 = arith.constant 0 : i32
    %c0_i32_1 = arith.constant 0 : i32
    return %c0_i32, %c0_i32_0 : i32, i32
  }
  func.func @transform_9(%arg0: i32) -> (i32, i32, i32) {
    %c0_i32 = arith.constant 0 : i32
    %c0_i32_0 = arith.constant 0 : i32
    %c0_i32_1 = arith.constant 0 : i32
    return %arg0, %c0_i32, %c0_i32_0 : i32, i32, i32
  }
}

</mosaic_0001>

<llo_original>
// kernel: vat3d_v2_feat_forward.3
$region0: #{vat3d_v2_feat_forward.3}
  #allocation0 [shape = 'u32[]', space=smem, size = 0x4, offset = 0x4, fixed_abs, tag = 'smem constant byte address 0x4 - core index']
  #allocation1 [shape = 'u32[144,128]{1,0:T(1,128)}', space=vmem, size = 0x12000, scoped, tag = 'internal scratch']
  #allocation2 [shape = 'f32[16,512]{1,0:T(8,128)}', space=vmem, size = 0x8000, scoped, tag = 'scratch operand']
  %s0 = inlined_call_operand.vmem [shape: f32[2,16,512], index: 0, kind: input, shape index: {}, may-alias: {0,4,7}]
  %s1 = inlined_call_operand.vmem [shape: f32[2,16,512], index: 1, kind: input, shape index: {}]
  %s2 = inlined_call_operand.vmem [shape: f32[2,16,2], index: 2, kind: input, shape index: {}, may-alias: {2,5}]
  %s3 = inlined_call_operand.vmem [shape: f32[2,2,1], index: 3, kind: input, shape index: {}, may-alias: {3,6}]
  %s4 = inlined_call_operand.vmem [shape: f32[2,16,512], index: 4, kind: input, shape index: {}, may-alias: {0,4,7}]
  %s5 = inlined_call_operand.vmem [shape: f32[2,16,2], index: 5, kind: input, shape index: {}, may-alias: {2,5}]
  %s6 = inlined_call_operand.vmem [shape: f32[2,2,1], index: 6, kind: input, shape index: {}, may-alias: {3,6}]
  %s7 = inlined_call_operand.vmem [shape: f32[2,16,512], index: 7, kind: input, shape index: {}, may-alias: {0,4,7}]
  %s8 = inlined_call_operand.vmem [shape: f32[1,512], index: 8, kind: input, shape index: {}]
  %s9 = inlined_call_operand.vmem [shape: f32[2,8,128], index: 9, kind: output, shape index: {}]
  %s10 = sld [smem:[#allocation0]]
  $region69: #{vat3d_v2_feat_forward.3} parent=0
    _
  %s12 = ssub.s32 1, %s10
  %s13 = scalar_select 0, %s12, %s10
  loop: start=0, step=1, limit=4
  $region2: #{vat3d_v2_feat_forward.3} parent=0 // loop_pre_header
    _
  $region3: #{vat3d_v2_feat_forward.3} parent=0 // loop_header
    %s15 = sphi 0, %s19
    %p16 = scmp.ge.s32.totalorder %s15, 4
    %s25 = sphi 0, %s27
    %s28 = sphi 0, %s25
    %s29 = sphi 0, %s28
    %s45 = sphi 0, %s29
    %s51 = sphi 0, %s53
    %s54 = sphi 0, %s51
    %s55 = sphi 0, %s54
    %s71 = sphi 0, %s55
    %s77 = sphi 0, %s79
    %s80 = sphi 0, %s77
    %s81 = sphi 0, %s80
    %s97 = sphi 0, %s81
    %s103 = sphi 0, %s105
    %s106 = sphi 0, %s103
    %s107 = sphi 0, %s106
    %s123 = sphi 0, %s107
    %s131 = sphi 0, %s133
    %s134 = sphi 0, %s131
    %s135 = sphi 0, %s134
    %s151 = sphi 0, %s135
    %s159 = sphi 0, %s161
    %s162 = sphi 0, %s159
    %s163 = sphi 0, %s162
    %s179 = sphi 0, %s163
    %s187 = sphi 0, %s189
    %s190 = sphi 0, %s187
    %s191 = sphi 0, %s190
    %s207 = sphi 0, %s191
    %s211 = sphi 0, %s211
    %s213 = sphi 0, %s211
    %s214 = sphi 0, %s213
    %s228 = sphi 0, %s214
    %s232 = sphi 0, %s232
    %s234 = sphi 0, %s232
    %s235 = sphi 0, %s234
    %s249 = sphi 0, %s235
    %s255 = sphi 0, %s257
    %s258 = sphi 0, %s255
    %s259 = sphi 0, %s258
    %s275 = sphi 0, %s259
  $region4: #{vat3d_v2_feat_forward.3} parent=0 // loop_header_branch
    %18 = sbr.rel (%p16) target = $region8
  $region5: #{vat3d_v2_feat_forward.3} parent=0 // loop_body
    %s20 = ssub.s32 %s15, 1
    %s21 = ssub.s32 %s15, 2
    %s22 = sadd.s32 %s15, 1
    %s23 = ssub.s32 %s15, %s22
    %p24 = scmp.eq.s32.totalorder %s23, 0
    %s26 = sadd.s32 %s25, 1
    %s27 = scalar_select %p24, %s25, %s26
    %p30 = pneg %p24
    %p31 = scmp.eq.s32.totalorder %s15, 1
    %p32 = por %p30, %p31
    %p33 = scmp.ne.s32.totalorder %s25, %s28
    %p34 = scmp.eq.s32.totalorder %s15, 0
    %p35 = por %p33, %p34
    %p36 = scmp.ne.s32.totalorder %s25, %s28
    %p37 = scmp.eq.s32.totalorder %s20, 1
    %p38 = por %p36, %p37
    %p39 = scmp.ne.s32.totalorder %s28, %s29
    %p40 = scmp.eq.s32.totalorder %s20, 0
    %p41 = por %p39, %p40
    %p42 = scmp.ne.s32.totalorder %s28, %s29
    %p43 = scmp.eq.s32.totalorder %s21, 1
    %p44 = por %p42, %p43
    %p46 = scmp.ne.s32.totalorder %s29, %s45
    %p47 = scmp.eq.s32.totalorder %s21, 0
    %p48 = por %p46, %p47
    %s49 = ssub.s32 %s15, %s22
    %p50 = scmp.eq.s32.totalorder %s49, 0
    %s52 = sadd.s32 %s51, 1
    %s53 = scalar_select %p50, %s51, %s52
    %p56 = pneg %p50
    %p57 = scmp.eq.s32.totalorder %s15, 1
    %p58 = por %p56, %p57
    %p59 = scmp.ne.s32.totalorder %s51, %s54
    %p60 = scmp.eq.s32.totalorder %s15, 0
    %p61 = por %p59, %p60
    %p62 = scmp.ne.s32.totalorder %s51, %s54
    %p63 = scmp.eq.s32.totalorder %s20, 1
    %p64 = por %p62, %p63
    %p65 = scmp.ne.s32.totalorder %s54, %s55
    %p66 = scmp.eq.s32.totalorder %s20, 0
    %p67 = por %p65, %p66
    %p68 = scmp.ne.s32.totalorder %s54, %s55
    %p69 = scmp.eq.s32.totalorder %s21, 1
    %p70 = por %p68, %p69
    %p72 = scmp.ne.s32.totalorder %s55, %s71
    %p73 = scmp.eq.s32.totalorder %s21, 0
    %p74 = por %p72, %p73
    %s75 = ssub.s32 %s15, %s22
    %p76 = scmp.eq.s32.totalorder %s75, 0
    %s78 = sadd.s32 %s77, 1
    %s79 = scalar_select %p76, %s77, %s78
    %p82 = pneg %p76
    %p83 = scmp.eq.s32.totalorder %s15, 1
    %p84 = por %p82, %p83
    %p85 = scmp.ne.s32.totalorder %s77, %s80
    %p86 = scmp.eq.s32.totalorder %s15, 0
    %p87 = por %p85, %p86
    %p88 = scmp.ne.s32.totalorder %s77, %s80
    %p89 = scmp.eq.s32.totalorder %s20, 1
    %p90 = por %p88, %p89
    %p91 = scmp.ne.s32.totalorder %s80, %s81
    %p92 = scmp.eq.s32.totalorder %s20, 0
    %p93 = por %p91, %p92
    %p94 = scmp.ne.s32.totalorder %s80, %s81
    %p95 = scmp.eq.s32.totalorder %s21, 1
    %p96 = por %p94, %p95
    %p98 = scmp.ne.s32.totalorder %s81, %s97
    %p99 = scmp.eq.s32.totalorder %s21, 0
    %p100 = por %p98, %p99
    %s101 = ssub.s32 %s15, %s22
    %p102 = scmp.eq.s32.totalorder %s101, 0
    %s104 = sadd.s32 %s103, 1
    %s105 = scalar_select %p102, %s103, %s104
    %p108 = pneg %p102
    %p109 = scmp.eq.s32.totalorder %s15, 1
    %p110 = por %p108, %p109
    %p111 = scmp.ne.s32.totalorder %s103, %s106
    %p112 = scmp.eq.s32.totalorder %s15, 0
    %p113 = por %p111, %p112
    %p114 = scmp.ne.s32.totalorder %s103, %s106
    %p115 = scmp.eq.s32.totalorder %s20, 1
    %p116 = por %p114, %p115
    %p117 = scmp.ne.s32.totalorder %s106, %s107
    %p118 = scmp.eq.s32.totalorder %s20, 0
    %p119 = por %p117, %p118
    %p120 = scmp.ne.s32.totalorder %s106, %s107
    %p121 = scmp.eq.s32.totalorder %s21, 1
    %p122 = por %p120, %p121
    %p124 = scmp.ne.s32.totalorder %s107, %s123
    %p125 = scmp.eq.s32.totalorder %s21, 0
    %p126 = por %p124, %p125
    %s127 = ssub.s32 1, %s15
    %s128 = ssub.s32 1, %s22
    %s129 = ssub.s32 %s127, %s128
    %p130 = scmp.eq.s32.totalorder %s129, 0
    %s132 = sadd.s32 %s131, 1
    %s133 = scalar_select %p130, %s131, %s132
    %p136 = pneg %p130
    %p137 = scmp.eq.s32.totalorder %s15, 1
    %p138 = por %p136, %p137
    %p139 = scmp.ne.s32.totalorder %s131, %s134
    %p140 = scmp.eq.s32.totalorder %s15, 0
    %p141 = por %p139, %p140
    %p142 = scmp.ne.s32.totalorder %s131, %s134
    %p143 = scmp.eq.s32.totalorder %s20, 1
    %p144 = por %p142, %p143
    %p145 = scmp.ne.s32.totalorder %s134, %s135
    %p146 = scmp.eq.s32.totalorder %s20, 0
    %p147 = por %p145, %p146
    %p148 = scmp.ne.s32.totalorder %s134, %s135
    %p149 = scmp.eq.s32.totalorder %s21, 1
    %p150 = por %p148, %p149
    %p152 = scmp.ne.s32.totalorder %s135, %s151
    %p153 = scmp.eq.s32.totalorder %s21, 0
    %p154 = por %p152, %p153
    %s155 = ssub.s32 1, %s15
    %s156 = ssub.s32 1, %s22
    %s157 = ssub.s32 %s155, %s156
    %p158 = scmp.eq.s32.totalorder %s157, 0
    %s160 = sadd.s32 %s159, 1
    %s161 = scalar_select %p158, %s159, %s160
    %p164 = pneg %p158
    %p165 = scmp.eq.s32.totalorder %s15, 1
    %p166 = por %p164, %p165
    %p167 = scmp.ne.s32.totalorder %s159, %s162
    %p168 = scmp.eq.s32.totalorder %s15, 0
    %p169 = por %p167, %p168
    %p170 = scmp.ne.s32.totalorder %s159, %s162
    %p171 = scmp.eq.s32.totalorder %s20, 1
    %p172 = por %p170, %p171
    %p173 = scmp.ne.s32.totalorder %s162, %s163
    %p174 = scmp.eq.s32.totalorder %s20, 0
    %p175 = por %p173, %p174
    %p176 = scmp.ne.s32.totalorder %s162, %s163
    %p177 = scmp.eq.s32.totalorder %s21, 1
    %p178 = por %p176, %p177
    %p180 = scmp.ne.s32.totalorder %s163, %s179
    %p181 = scmp.eq.s32.totalorder %s21, 0
    %p182 = por %p180, %p181
    %s183 = ssub.s32 1, %s15
    %s184 = ssub.s32 1, %s22
    %s185 = ssub.s32 %s183, %s184
    %p186 = scmp.eq.s32.totalorder %s185, 0
    %s188 = sadd.s32 %s187, 1
    %s189 = scalar_select %p186, %s187, %s188
    %p192 = pneg %p186
    %p193 = scmp.eq.s32.totalorder %s15, 1
    %p194 = por %p192, %p193
    %p195 = scmp.ne.s32.totalorder %s187, %s190
    %p196 = scmp.eq.s32.totalorder %s15, 0
    %p197 = por %p195, %p196
    %p198 = scmp.ne.s32.totalorder %s187, %s190
    %p199 = scmp.eq.s32.totalorder %s20, 1
    %p200 = por %p198, %p199
    %p201 = scmp.ne.s32.totalorder %s190, %s191
    %p202 = scmp.eq.s32.totalorder %s20, 0
    %p203 = por %p201, %p202
    %p204 = scmp.ne.s32.totalorder %s190, %s191
    %p205 = scmp.eq.s32.totalorder %s21, 1
    %p206 = por %p204, %p205
    %p208 = scmp.ne.s32.totalorder %s191, %s207
    %p209 = scmp.eq.s32.totalorder %s21, 0
    %p210 = por %p208, %p209
    %s212 = sadd.s32 %s211, 1
    %p215 = scmp.eq.s32.totalorder %s15, 1
    %p216 = scmp.ne.s32.totalorder %s211, %s213
    %p217 = scmp.eq.s32.totalorder %s15, 0
    %p218 = por %p216, %p217
    %p219 = scmp.ne.s32.totalorder %s211, %s213
    %p220 = scmp.eq.s32.totalorder %s20, 1
    %p221 = por %p219, %p220
    %p222 = scmp.ne.s32.totalorder %s213, %s214
    %p223 = scmp.eq.s32.totalorder %s20, 0
    %p224 = por %p222, %p223
    %p225 = scmp.ne.s32.totalorder %s213, %s214
    %p226 = scmp.eq.s32.totalorder %s21, 1
    %p227 = por %p225, %p226
    %p229 = scmp.ne.s32.totalorder %s214, %s228
    %p230 = scmp.eq.s32.totalorder %s21, 0
    %p231 = por %p229, %p230
    %s233 = sadd.s32 %s232, 1
    %p236 = scmp.eq.s32.totalorder %s15, 1
    %p237 = scmp.ne.s32.totalorder %s232, %s234
    %p238 = scmp.eq.s32.totalorder %s15, 0
    %p239 = por %p237, %p238
    %p240 = scmp.ne.s32.totalorder %s232, %s234
    %p241 = scmp.eq.s32.totalorder %s20, 1
    %p242 = por %p240, %p241
    %p243 = scmp.ne.s32.totalorder %s234, %s235
    %p244 = scmp.eq.s32.totalorder %s20, 0
    %p245 = por %p243, %p244
    %p246 = scmp.ne.s32.totalorder %s234, %s235
    %p247 = scmp.eq.s32.totalorder %s21, 1
    %p248 = por %p246, %p247
    %p250 = scmp.ne.s32.totalorder %s235, %s249
    %p251 = scmp.eq.s32.totalorder %s21, 0
    %p252 = por %p250, %p251
    %s253 = ssub.s32 %s15, %s22
    %p254 = scmp.eq.s32.totalorder %s253, 0
    %s256 = sadd.s32 %s255, 1
    %s257 = scalar_select %p254, %s255, %s256
    %p260 = pneg %p254
    %p261 = scmp.eq.s32.totalorder %s15, 1
    %p262 = por %p260, %p261
    %p263 = scmp.ne.s32.totalorder %s255, %s258
    %p264 = scmp.eq.s32.totalorder %s15, 0
    %p265 = por %p263, %p264
    %p266 = scmp.ne.s32.totalorder %s255, %s258
    %p267 = scmp.eq.s32.totalorder %s20, 1
    %p268 = por %p266, %p267
    %p269 = scmp.ne.s32.totalorder %s258, %s259
    %p270 = scmp.eq.s32.totalorder %s20, 0
    %p271 = por %p269, %p270
    %p272 = scmp.ne.s32.totalorder %s258, %s259
    %p273 = scmp.eq.s32.totalorder %s21, 1
    %p274 = por %p272, %p273
    %p276 = scmp.ne.s32.totalorder %s259, %s275
    %p277 = scmp.eq.s32.totalorder %s21, 0
    %p278 = por %p276, %p277
    %p279 = scmp.le.s32.totalorder 1, %s15
    %p280 = scmp.lt.s32.totalorder %s15, 3
    %p281 = pnand %p279, %p280
    %p282 = pneg %p281
    // Predicated region
    $region9: #{vat3d_v2_feat_forward.3} parent=5 // pred_check
      _
    $region10: #{vat3d_v2_feat_forward.3} parent=5 // pred_check_branch
      %284 = sbr.rel (%p281) target = $region12
    $region11: #{vat3d_v2_feat_forward.3} parent=5 // pred_region
      %s285 = ssub.s32 %s15, 1
      // Predicated region
      $region13: #{vat3d_v2_feat_forward.3} parent=11 // pred_check
        %p286 = pneg %p224
      $region14: #{vat3d_v2_feat_forward.3} parent=11 // pred_check_branch
        %288 = sbr.rel (%p286) target = $region16
      $region15: #{vat3d_v2_feat_forward.3} parent=11 // pred_region
        _
      $region16: #{vat3d_v2_feat_forward.3} parent=11 // pred_fallthru
        _
      // Predicated region
      $region17: #{vat3d_v2_feat_forward.3} parent=11 // pred_check
        %p289 = pneg %p245
      $region18: #{vat3d_v2_feat_forward.3} parent=11 // pred_check_branch
        %291 = sbr.rel (%p289) target = $region20
      $region19: #{vat3d_v2_feat_forward.3} parent=11 // pred_region
        _
      $region20: #{vat3d_v2_feat_forward.3} parent=11 // pred_fallthru
        _
    $region12: #{vat3d_v2_feat_forward.3} parent=5 // pred_fallthru
      _
    %p292 = scmp.lt.s32.totalorder %s15, 2
    // Predicated region
    $region21: #{vat3d_v2_feat_forward.3} parent=5 // pred_check
      %p293 = pneg %p292
    $region22: #{vat3d_v2_feat_forward.3} parent=5 // pred_check_branch
      %295 = sbr.rel (%p293) target = $region24
    $region23: #{vat3d_v2_feat_forward.3} parent=5 // pred_region
      // Predicated region
      $region25: #{vat3d_v2_feat_forward.3} parent=23 // pred_check
        %p296 = pneg %p35
      $region26: #{vat3d_v2_feat_forward.3} parent=23 // pred_check_branch
        %298 = sbr.rel (%p296) target = $region28
      $region27: #{vat3d_v2_feat_forward.3} parent=23 // pred_region
        %p299 = scmp.lt.s32.totalorder %s15, 1
        %s300 = scalar_select %p299, %s15, 1
        %s301 = smul.addr %s300, 8
        %s302 = smul.addr %s301, 8
        %s303 = scalar_lea.vmem %s0, %s302
      $region28: #{vat3d_v2_feat_forward.3} parent=23 // pred_fallthru
        _
      // Predicated region
      $region29: #{vat3d_v2_feat_forward.3} parent=23 // pred_check
        %p304 = pneg %p61
      $region30: #{vat3d_v2_feat_forward.3} parent=23 // pred_check_branch
        %306 = sbr.rel (%p304) target = $region32
      $region31: #{vat3d_v2_feat_forward.3} parent=23 // pred_region
        %p307 = scmp.lt.s32.totalorder %s15, 1
        %s308 = scalar_select %p307, %s15, 1
        %s309 = smul.addr %s308, 8
        %s310 = smul.addr %s309, 8
        %s311 = scalar_lea.vmem %s1, %s310
      $region32: #{vat3d_v2_feat_forward.3} parent=23 // pred_fallthru
        _
      // Predicated region
      $region33: #{vat3d_v2_feat_forward.3} parent=23 // pred_check
        %p312 = pneg %p87
      $region34: #{vat3d_v2_feat_forward.3} parent=23 // pred_check_branch
        %314 = sbr.rel (%p312) target = $region36
      $region35: #{vat3d_v2_feat_forward.3} parent=23 // pred_region
        %p315 = scmp.lt.s32.totalorder %s15, 1
        %s316 = scalar_select %p315, %s15, 1
        %s317 = smul.addr %s316, 2
        %s318 = smul.addr %s317, 8
        %s319 = scalar_lea.vmem %s2, %s318
      $region36: #{vat3d_v2_feat_forward.3} parent=23 // pred_fallthru
        _
      // Predicated region
      $region37: #{vat3d_v2_feat_forward.3} parent=23 // pred_check
        %p320 = pneg %p113
      $region38: #{vat3d_v2_feat_forward.3} parent=23 // pred_check_branch
        %322 = sbr.rel (%p320) target = $region40
      $region39: #{vat3d_v2_feat_forward.3} parent=23 // pred_region
        %p323 = scmp.lt.s32.totalorder %s15, 1
        %s324 = scalar_select %p323, %s15, 1
        %s325 = smul.addr %s324, 2
        %s326 = scalar_lea.vmem %s3, %s325
      $region40: #{vat3d_v2_feat_forward.3} parent=23 // pred_fallthru
        _
      // Predicated region
      $region41: #{vat3d_v2_feat_forward.3} parent=23 // pred_check
        %p327 = pneg %p141
      $region42: #{vat3d_v2_feat_forward.3} parent=23 // pred_check_branch
        %329 = sbr.rel (%p327) target = $region44
      $region43: #{vat3d_v2_feat_forward.3} parent=23 // pred_region
        %s330 = ssub.s32 1, %s15
        %p331 = scmp.lt.s32.totalorder %s330, 1
        %s332 = scalar_select %p331, %s330, 1
        %s333 = smul.addr %s332, 8
        %s334 = smul.addr %s333, 8
        %s335 = scalar_lea.vmem %s4, %s334
        %s336 = ssub.s32 1, %s15
      $region44: #{vat3d_v2_feat_forward.3} parent=23 // pred_fallthru
        _
      // Predicated region
      $region45: #{vat3d_v2_feat_forward.3} parent=23 // pred_check
        %p337 = pneg %p169
      $region46: #{vat3d_v2_feat_forward.3} parent=23 // pred_check_branch
        %339 = sbr.rel (%p337) target = $region48
      $region47: #{vat3d_v2_feat_forward.3} parent=23 // pred_region
        %s340 = ssub.s32 1, %s15
        %p341 = scmp.lt.s32.totalorder %s340, 1
        %s342 = scalar_select %p341, %s340, 1
        %s343 = smul.addr %s342, 2
        %s344 = smul.addr %s343, 8
        %s345 = scalar_lea.vmem %s5, %s344
        %s346 = ssub.s32 1, %s15
      $region48: #{vat3d_v2_feat_forward.3} parent=23 // pred_fallthru
        _
      // Predicated region
      $region49: #{vat3d_v2_feat_forward.3} parent=23 // pred_check
        %p347 = pneg %p197
      $region50: #{vat3d_v2_feat_forward.3} parent=23 // pred_check_branch
        %349 = sbr.rel (%p347) target = $region52
      $region51: #{vat3d_v2_feat_forward.3} parent=23 // pred_region
        %s350 = ssub.s32 1, %s15
        %p351 = scmp.lt.s32.totalorder %s350, 1
        %s352 = scalar_select %p351, %s350, 1
        %s353 = smul.addr %s352, 2
        %s354 = scalar_lea.vmem %s6, %s353
        %s355 = ssub.s32 1, %s15
      $region52: #{vat3d_v2_feat_forward.3} parent=23 // pred_fallthru
        _
    $region24: #{vat3d_v2_feat_forward.3} parent=5 // pred_fallthru
      _
    %p356 = scmp.le.s32.totalorder 1, %s15
    %p357 = scmp.lt.s32.totalorder %s15, 3
    %p358 = pnand %p356, %p357
    %p359 = pneg %p358
    // Predicated region
    $region53: #{vat3d_v2_feat_forward.3} parent=5 // pred_check
      _
    $region54: #{vat3d_v2_feat_forward.3} parent=5 // pred_check_branch
      %361 = sbr.rel (%p358) target = $region56
    $region55: #{vat3d_v2_feat_forward.3} parent=5 // pred_region
      %s362 = ssub.s32 %s15, 1
      %p363 = scmp.lt.s32.totalorder %s20, 1
      %s364 = scalar_select %p363, %s20, 1
      %s365 = smul.addr %s364, 8
      %s366 = smul.addr %s365, 8
      %s367 = scalar_lea.vmem %s0, %s366
      %p368 = pneg %p41
      %p369 = pneg %p38
      %p370 = scmp.lt.s32.totalorder %s20, 1
      %s371 = scalar_select %p370, %s20, 1
      %s372 = smul.addr %s371, 8
      %s373 = smul.addr %s372, 8
      %s374 = scalar_lea.vmem %s1, %s373
      %p375 = pneg %p67
      %p376 = pneg %p64
      %p377 = scmp.lt.s32.totalorder %s20, 1
      %s378 = scalar_select %p377, %s20, 1
      %s379 = smul.addr %s378, 2
      %s380 = smul.addr %s379, 8
      %s381 = scalar_lea.vmem %s2, %s380
      %p382 = pneg %p93
      %p383 = pneg %p90
      %p384 = scmp.lt.s32.totalorder %s20, 1
      %s385 = scalar_select %p384, %s20, 1
      %s386 = smul.addr %s385, 2
      %s387 = scalar_lea.vmem %s3, %s386
      %p388 = pneg %p119
      %p389 = pneg %p116
      %s390 = ssub.s32 1, %s20
      %p391 = scmp.lt.s32.totalorder %s390, 1
      %s392 = scalar_select %p391, %s390, 1
      %s393 = smul.addr %s392, 8
      %s394 = smul.addr %s393, 8
      %s395 = scalar_lea.vmem %s4, %s394
      %p396 = pneg %p147
      %p397 = pneg %p144
      %s398 = ssub.s32 1, %s20
      %p399 = scmp.lt.s32.totalorder %s398, 1
      %s400 = scalar_select %p399, %s398, 1
      %s401 = smul.addr %s400, 2
      %s402 = smul.addr %s401, 8
      %s403 = scalar_lea.vmem %s5, %s402
      %p404 = pneg %p175
      %p405 = pneg %p172
      %s406 = ssub.s32 1, %s20
      %p407 = scmp.lt.s32.totalorder %s406, 1
      %s408 = scalar_select %p407, %s406, 1
      %s409 = smul.addr %s408, 2
      %s410 = scalar_lea.vmem %s6, %s409
      %p411 = pneg %p203
      %p412 = pneg %p200
      %p413 = pneg %p224
      %p414 = pneg %p221
      %p415 = pneg %p245
      %p416 = pneg %p242
      %p417 = pneg %p271
      %p418 = pneg %p268
      %p419 = scmp.lt.s32.totalorder %s20, 1
      %s420 = scalar_select %p419, %s20, 1
      %s421 = smul.addr %s420, 8
      %s422 = scalar_lea.vmem %s9, %s421
      %p423 = scmp.lt.s32.totalorder %s20, 1
      %s424 = scalar_select %p423, %s20, 1
      %s425 = smul.addr %s424, 8
      %s426 = smul.addr %s425, 8
      %s427 = scalar_lea.vmem %s0, %s426
      %p428 = scmp.lt.s32.totalorder %s20, 1
      %s429 = scalar_select %p428, %s20, 1
      %s430 = smul.addr %s429, 8
      %s431 = smul.addr %s430, 8
      %s432 = scalar_lea.vmem %s1, %s431
      %p433 = scmp.lt.s32.totalorder %s20, 1
      %s434 = scalar_select %p433, %s20, 1
      %s435 = smul.addr %s434, 2
      %s436 = smul.addr %s435, 8
      %s437 = scalar_lea.vmem %s2, %s436
      %p438 = scmp.lt.s32.totalorder %s20, 1
      %s439 = scalar_select %p438, %s20, 1
      %s440 = smul.addr %s439, 2
      %s441 = scalar_lea.vmem %s3, %s440
      %s442 = ssub.s32 1, %s20
      %p443 = scmp.lt.s32.totalorder %s442, 1
      %s444 = scalar_select %p443, %s442, 1
      %s445 = smul.addr %s444, 8
      %s446 = smul.addr %s445, 8
      %s447 = scalar_lea.vmem %s4, %s446
      %s448 = ssub.s32 1, %s20
      %s449 = ssub.s32 1, %s20
      %p450 = scmp.lt.s32.totalorder %s449, 1
      %s451 = scalar_select %p450, %s449, 1
      %s452 = smul.addr %s451, 2
      %s453 = smul.addr %s452, 8
      %s454 = scalar_lea.vmem %s5, %s453
      %s455 = ssub.s32 1, %s20
      %s456 = ssub.s32 1, %s20
      %p457 = scmp.lt.s32.totalorder %s456, 1
      %s458 = scalar_select %p457, %s456, 1
      %s459 = smul.addr %s458, 2
      %s460 = scalar_lea.vmem %s6, %s459
      %s461 = ssub.s32 1, %s20
      %p462 = scmp.lt.s32.totalorder %s20, 1
      %s463 = scalar_select %p462, %s20, 1
      %s464 = smul.addr %s463, 8
      %s465 = scalar_lea.vmem %s9, %s464
      %v466 = vld [vmem:[%s8] sm:$0xf]
      %v467 = vld [vmem:[%s437] sm:$0xff]
      %v468 = vld [vmem:[%s437 + $0x8] sm:$0xff]
      %v469 = vld [vmem:[%s441] sm:$0x3]
      %v470 = vld [vmem:[%s447] sm:$0xff]
      %v471 = vld [vmem:[%s447 + $0x8] sm:$0xff]
      %v472 = vld [vmem:[%s447 + $0x10] sm:$0xff]
      %v473 = vld [vmem:[%s447 + $0x18] sm:$0xff]
      %v474 = vld [vmem:[%s447 + $0x20] sm:$0xff]
      %v475 = vld [vmem:[%s447 + $0x28] sm:$0xff]
      %v476 = vld [vmem:[%s447 + $0x30] sm:$0xff]
      %v477 = vld [vmem:[%s447 + $0x38] sm:$0xff]
      %v478 = vld [vmem:[%s454] sm:$0xff]
      %v479 = vld [vmem:[%s454 + $0x8] sm:$0xff]
      %v480 = vld [vmem:[%s460] sm:$0x3]
      %482 = vset.pattern.permute.xlu0 0
      %483 = vperm.xlu0 %482, %v478
      %v484 = vpop.permute.xlu0 %483
      %487 = vset.pattern.permute.xlu0 0
      %488 = vperm.xlu0 %487, %v479
      %v489 = vpop.permute.xlu0 %488
      %v491 = vmul.f32 %v470, %v484
      %v492 = vmul.f32 %v471, %v484
      %v493 = vmul.f32 %v472, %v484
      %v494 = vmul.f32 %v473, %v484
      %v495 = vmul.f32 %v474, %v489
      %v496 = vmul.f32 %v475, %v489
      %v497 = vmul.f32 %v476, %v489
      %v498 = vmul.f32 %v477, %v489
      %v499 = vadd.f32 %v491, %v495
      %v500 = vrot.slane %v499, 4
      %v501 = vadd.f32 %v499, %v500
      %v502 = vrot.slane %v501, 2
      %v503 = vadd.f32 %v501, %v502
      %v504 = vrot.slane %v503, 1
      %v505 = vadd.f32 %v503, %v504
      %v506 = vadd.f32 %v492, %v496
      %v507 = vrot.slane %v506, 4
      %v508 = vadd.f32 %v506, %v507
      %v509 = vrot.slane %v508, 2
      %v510 = vadd.f32 %v508, %v509
      %v511 = vrot.slane %v510, 1
      %v512 = vadd.f32 %v510, %v511
      %v513 = vadd.f32 %v493, %v497
      %v514 = vrot.slane %v513, 4
      %v515 = vadd.f32 %v513, %v514
      %v516 = vrot.slane %v515, 2
      %v517 = vadd.f32 %v515, %v516
      %v518 = vrot.slane %v517, 1
      %v519 = vadd.f32 %v517, %v518
      %v520 = vadd.f32 %v494, %v498
      %v521 = vrot.slane %v520, 4
      %v522 = vadd.f32 %v520, %v521
      %v523 = vrot.slane %v522, 2
      %v524 = vadd.f32 %v522, %v523
      %v525 = vrot.slane %v524, 1
      %v526 = vadd.f32 %v524, %v525
      %528 = vset.pattern.permute.xlu0 0
      %529 = vperm.xlu0 %528, %v480
      %v530 = vpop.permute.xlu0 %529
      %v532 = vadd.f32 %v505, %v530
      %v533 = vadd.f32 %v512, %v530
      %v534 = vadd.f32 %v519, %v530
      %v535 = vadd.f32 %v526, %v530
      %536 = vset.pattern.permute.xlu0 1
      %537 = vperm.xlu0 %536, %v478
      %v538 = vpop.permute.xlu0 %537
      %540 = vset.pattern.permute.xlu0 1
      %541 = vperm.xlu0 %540, %v479
      %v542 = vpop.permute.xlu0 %541
      %v544 = vmul.f32 %v470, %v538
      %v545 = vmul.f32 %v471, %v538
      %v546 = vmul.f32 %v472, %v538
      %v547 = vmul.f32 %v473, %v538
      %v548 = vmul.f32 %v474, %v542
      %v549 = vmul.f32 %v475, %v542
      %v550 = vmul.f32 %v476, %v542
      %v551 = vmul.f32 %v477, %v542
      %v552 = vadd.f32 %v544, %v548
      %v553 = vrot.slane %v552, 4
      %v554 = vadd.f32 %v552, %v553
      %v555 = vrot.slane %v554, 2
      %v556 = vadd.f32 %v554, %v555
      %v557 = vrot.slane %v556, 1
      %v558 = vadd.f32 %v556, %v557
      %v559 = vadd.f32 %v545, %v549
      %v560 = vrot.slane %v559, 4
      %v561 = vadd.f32 %v559, %v560
      %v562 = vrot.slane %v561, 2
      %v563 = vadd.f32 %v561, %v562
      %v564 = vrot.slane %v563, 1
      %v565 = vadd.f32 %v563, %v564
      %v566 = vadd.f32 %v546, %v550
      %v567 = vrot.slane %v566, 4
      %v568 = vadd.f32 %v566, %v567
      %v569 = vrot.slane %v568, 2
      %v570 = vadd.f32 %v568, %v569
      %v571 = vrot.slane %v570, 1
      %v572 = vadd.f32 %v570, %v571
      %v573 = vadd.f32 %v547, %v551
      %v574 = vrot.slane %v573, 4
      %v575 = vadd.f32 %v573, %v574
      %v576 = vrot.slane %v575, 2
      %v577 = vadd.f32 %v575, %v576
      %v578 = vrot.slane %v577, 1
      %v579 = vadd.f32 %v577, %v578
      %v580 = vadd.f32 %v558, %v530
      %v581 = vadd.f32 %v565, %v530
      %v582 = vadd.f32 %v572, %v530
      %v583 = vadd.f32 %v579, %v530
      %v588 = vrot.slane %v580, 1
      %v589 = vrot.slane %v581, 1
      %v590 = vrot.slane %v582, 1
      %v591 = vrot.slane %v583, 1
      %v596 = vsub.f32 %v532, %v588
      %v597 = vsub.f32 %v533, %v589
      %v598 = vsub.f32 %v534, %v590
      %v599 = vsub.f32 %v535, %v591
      %v600 = vmul.f32 %v596, 1.442695
      %v601 = vpow.pop %v600
      %v602 = vmul.f32 %v597, 1.442695
      %v603 = vpow.pop %v602
      %v604 = vmul.f32 %v598, 1.442695
      %v605 = vpow.pop %v604
      %v606 = vmul.f32 %v599, 1.442695
      %v607 = vpow.pop %v606
      %v608 = vadd.f32 %v601, 1.0
      %v609 = vadd.f32 %v603, 1.0
      %v610 = vadd.f32 %v605, 1.0
      %v611 = vadd.f32 %v607, 1.0
      %v612 = vrcp.pop %v608
      %v613 = vmul.f32 1.0, %v612
      %v614 = vrcp.pop %v609
      %v615 = vmul.f32 1.0, %v614
      %v616 = vrcp.pop %v610
      %v617 = vmul.f32 1.0, %v616
      %v618 = vrcp.pop %v611
      %v619 = vmul.f32 1.0, %v618
      %v620 = vsub.f32 1.0, %v613
      %v621 = vsub.f32 1.0, %v615
      %v622 = vsub.f32 1.0, %v617
      %v623 = vsub.f32 1.0, %v619
      %v625 = vlaneseq
      %v626 = vshrl.u32 %v625, 7
      %v627 = vsub.s32 0, %v626
      %v628 = vrot.slane %v466, %v627
      %v629 = vlaneseq
      %v630 = vshrl.u32 %v629, 7
      %v631 = vsub.s32 1, %v630
      %v632 = vrot.slane %v466, %v631
      %v633 = vlaneseq
      %v634 = vshrl.u32 %v633, 7
      %v635 = vsub.s32 2, %v634
      %v636 = vrot.slane %v466, %v635
      %v637 = vlaneseq
      %v638 = vshrl.u32 %v637, 7
      %v639 = vsub.s32 3, %v638
      %v640 = vrot.slane %v466, %v639
      %v645 = vmul.f32 %v620, %v628
      %v646 = vmul.f32 %v621, %v632
      %v647 = vmul.f32 %v622, %v636
      %v648 = vmul.f32 %v623, %v640
      %v649 = vmul.f32 %v613, %v628
      %v650 = vmul.f32 %v615, %v632
      %v651 = vmul.f32 %v617, %v636
      %v652 = vmul.f32 %v619, %v640
      %vm653 = vcmask 1040384
      %v654 = vsel %vm653, %v645, 0.0
      %v655 = vsel %vm653, %v646, 0.0
      %v656 = vadd.f32 %v654, %v655
      %v657 = vsel %vm653, %v647, 0.0
      %v658 = vadd.f32 %v656, %v657
      %v659 = vsel %vm653, %v648, 0.0
      %v660 = vadd.f32 %v658, %v659
      %661 = vadd.xlane.f32.xlu0 %v660
      %v662 = vpop.xlane.xlu0 %661
      %v663 = vsel %vm653, %v649, 0.0
      %v664 = vsel %vm653, %v650, 0.0
      %v665 = vadd.f32 %v663, %v664
      %v666 = vsel %vm653, %v651, 0.0
      %v667 = vadd.f32 %v665, %v666
      %v668 = vsel %vm653, %v652, 0.0
      %v669 = vadd.f32 %v667, %v668
      %670 = vadd.xlane.f32.xlu0 %v669
      %v671 = vpop.xlane.xlu0 %670
      %v672 = vadd.f32 %v662, %v671
      %v673 = vld [vmem:[%s432] sm:$0xff]
      %v674 = vld [vmem:[%s432 + $0x8] sm:$0xff]
      %v675 = vld [vmem:[%s432 + $0x10] sm:$0xff]
      %v676 = vld [vmem:[%s432 + $0x18] sm:$0xff]
      %v677 = vld [vmem:[%s432 + $0x20] sm:$0xff]
      %v678 = vld [vmem:[%s432 + $0x28] sm:$0xff]
      %v679 = vld [vmem:[%s432 + $0x30] sm:$0xff]
      %v680 = vld [vmem:[%s432 + $0x38] sm:$0xff]
      %681 = vst [vmem:[#allocation2] sm:$0xff] %v673
      %682 = vst [vmem:[#allocation2 + $0x8] sm:$0xff] %v674
      %683 = vst [vmem:[#allocation2 + $0x10] sm:$0xff] %v675
      %684 = vst [vmem:[#allocation2 + $0x18] sm:$0xff] %v676
      %685 = vst [vmem:[#allocation2 + $0x20] sm:$0xff] %v677
      %686 = vst [vmem:[#allocation2 + $0x28] sm:$0xff] %v678
      %687 = vst [vmem:[#allocation2 + $0x30] sm:$0xff] %v679
      %688 = vst [vmem:[#allocation2 + $0x38] sm:$0xff] %v680
      %v689 = vld [vmem:[%s427] sm:$0xff]
      %v690 = vld [vmem:[%s427 + $0x8] sm:$0xff]
      %v691 = vld [vmem:[%s427 + $0x10] sm:$0xff]
      %v692 = vld [vmem:[%s427 + $0x18] sm:$0xff]
      %v693 = vld [vmem:[%s427 + $0x20] sm:$0xff]
      %v694 = vld [vmem:[%s427 + $0x28] sm:$0xff]
      %v695 = vld [vmem:[%s427 + $0x30] sm:$0xff]
      %v696 = vld [vmem:[%s427 + $0x38] sm:$0xff]
      %v697 = vld [vmem:[#allocation2] sm:$0xff]
      %v698 = vld [vmem:[#allocation2 + $0x8] sm:$0xff]
      %v699 = vld [vmem:[#allocation2 + $0x10] sm:$0xff]
      %v700 = vld [vmem:[#allocation2 + $0x18] sm:$0xff]
      %v701 = vld [vmem:[#allocation2 + $0x20] sm:$0xff]
      %v702 = vld [vmem:[#allocation2 + $0x28] sm:$0xff]
      %v703 = vld [vmem:[#allocation2 + $0x30] sm:$0xff]
      %v704 = vld [vmem:[#allocation2 + $0x38] sm:$0xff]
      %v705 = vmul.f32 %v697, 10.0
      %v706 = vmul.f32 %v698, 10.0
      %v707 = vmul.f32 %v699, 10.0
      %v708 = vmul.f32 %v700, 10.0
      %v709 = vmul.f32 %v701, 10.0
      %v710 = vmul.f32 %v702, 10.0
      %v711 = vmul.f32 %v703, 10.0
      %v712 = vmul.f32 %v704, 10.0
      %v713 = vadd.f32 %v689, %v705
      %v714 = vadd.f32 %v690, %v706
      %v715 = vadd.f32 %v691, %v707
      %v716 = vadd.f32 %v692, %v708
      %v717 = vadd.f32 %v693, %v709
      %v718 = vadd.f32 %v694, %v710
      %v719 = vadd.f32 %v695, %v711
      %v720 = vadd.f32 %v696, %v712
      %722 = vset.pattern.permute.xlu0 0
      %723 = vperm.xlu0 %722, %v467
      %v724 = vpop.permute.xlu0 %723
      %727 = vset.pattern.permute.xlu0 0
      %728 = vperm.xlu0 %727, %v468
      %v729 = vpop.permute.xlu0 %728
      %v731 = vmul.f32 %v713, %v724
      %v732 = vmul.f32 %v714, %v724
      %v733 = vmul.f32 %v715, %v724
      %v734 = vmul.f32 %v716, %v724
      %v735 = vmul.f32 %v717, %v729
      %v736 = vmul.f32 %v718, %v729
      %v737 = vmul.f32 %v719, %v729
      %v738 = vmul.f32 %v720, %v729
      %v739 = vadd.f32 %v731, %v735
      %v740 = vrot.slane %v739, 4
      %v741 = vadd.f32 %v739, %v740
      %v742 = vrot.slane %v741, 2
      %v743 = vadd.f32 %v741, %v742
      %v744 = vrot.slane %v743, 1
      %v745 = vadd.f32 %v743, %v744
      %v746 = vadd.f32 %v732, %v736
      %v747 = vrot.slane %v746, 4
      %v748 = vadd.f32 %v746, %v747
      %v749 = vrot.slane %v748, 2
      %v750 = vadd.f32 %v748, %v749
      %v751 = vrot.slane %v750, 1
      %v752 = vadd.f32 %v750, %v751
      %v753 = vadd.f32 %v733, %v737
      %v754 = vrot.slane %v753, 4
      %v755 = vadd.f32 %v753, %v754
      %v756 = vrot.slane %v755, 2
      %v757 = vadd.f32 %v755, %v756
      %v758 = vrot.slane %v757, 1
      %v759 = vadd.f32 %v757, %v758
      %v760 = vadd.f32 %v734, %v738
      %v761 = vrot.slane %v760, 4
      %v762 = vadd.f32 %v760, %v761
      %v763 = vrot.slane %v762, 2
      %v764 = vadd.f32 %v762, %v763
      %v765 = vrot.slane %v764, 1
      %v766 = vadd.f32 %v764, %v765
      %768 = vset.pattern.permute.xlu0 0
      %769 = vperm.xlu0 %768, %v469
      %v770 = vpop.permute.xlu0 %769
      %v772 = vadd.f32 %v745, %v770
      %v773 = vadd.f32 %v752, %v770
      %v774 = vadd.f32 %v759, %v770
      %v775 = vadd.f32 %v766, %v770
      %776 = vset.pattern.permute.xlu0 1
      %777 = vperm.xlu0 %776, %v467
      %v778 = vpop.permute.xlu0 %777
      %780 = vset.pattern.permute.xlu0 1
      %781 = vperm.xlu0 %780, %v468
      %v782 = vpop.permute.xlu0 %781
      %v784 = vmul.f32 %v713, %v778
      %v785 = vmul.f32 %v714, %v778
      %v786 = vmul.f32 %v715, %v778
      %v787 = vmul.f32 %v716, %v778
      %v788 = vmul.f32 %v717, %v782
      %v789 = vmul.f32 %v718, %v782
      %v790 = vmul.f32 %v719, %v782
      %v791 = vmul.f32 %v720, %v782
      %v792 = vadd.f32 %v784, %v788
      %v793 = vrot.slane %v792, 4
      %v794 = vadd.f32 %v792, %v793
      %v795 = vrot.slane %v794, 2
      %v796 = vadd.f32 %v794, %v795
      %v797 = vrot.slane %v796, 1
      %v798 = vadd.f32 %v796, %v797
      %v799 = vadd.f32 %v785, %v789
      %v800 = vrot.slane %v799, 4
      %v801 = vadd.f32 %v799, %v800
      %v802 = vrot.slane %v801, 2
      %v803 = vadd.f32 %v801, %v802
      %v804 = vrot.slane %v803, 1
      %v805 = vadd.f32 %v803, %v804
      %v806 = vadd.f32 %v786, %v790
      %v807 = vrot.slane %v806, 4
      %v808 = vadd.f32 %v806, %v807
      %v809 = vrot.slane %v808, 2
      %v810 = vadd.f32 %v808, %v809
      %v811 = vrot.slane %v810, 1
      %v812 = vadd.f32 %v810, %v811
      %v813 = vadd.f32 %v787, %v791
      %v814 = vrot.slane %v813, 4
      %v815 = vadd.f32 %v813, %v814
      %v816 = vrot.slane %v815, 2
      %v817 = vadd.f32 %v815, %v816
      %v818 = vrot.slane %v817, 1
      %v819 = vadd.f32 %v817, %v818
      %v820 = vadd.f32 %v798, %v770
      %v821 = vadd.f32 %v805, %v770
      %v822 = vadd.f32 %v812, %v770
      %v823 = vadd.f32 %v819, %v770
      %v828 = vrot.slane %v820, 1
      %v829 = vrot.slane %v821, 1
      %v830 = vrot.slane %v822, 1
      %v831 = vrot.slane %v823, 1
      %v836 = vsub.f32 %v772, %v828
      %v837 = vsub.f32 %v773, %v829
      %v838 = vsub.f32 %v774, %v830
      %v839 = vsub.f32 %v775, %v831
      %v840 = vmul.f32 %v836, 1.442695
      %v841 = vpow.pop %v840
      %v842 = vmul.f32 %v837, 1.442695
      %v843 = vpow.pop %v842
      %v844 = vmul.f32 %v838, 1.442695
      %v845 = vpow.pop %v844
      %v846 = vmul.f32 %v839, 1.442695
      %v847 = vpow.pop %v846
      %v848 = vadd.f32 %v841, 1.0
      %v849 = vadd.f32 %v843, 1.0
      %v850 = vadd.f32 %v845, 1.0
      %v851 = vadd.f32 %v847, 1.0
      %v852 = vrcp.pop %v848
      %v853 = vrcp.pop %v849
      %v854 = vrcp.pop %v850
      %v855 = vrcp.pop %v851
      %v856 = vsub.f32 1.0, %v852
      %v857 = vsub.f32 1.0, %v853
      %v858 = vsub.f32 1.0, %v854
      %v859 = vsub.f32 1.0, %v855
      %v860 = vmul.f32 %v856, %v645
      %v861 = vmul.f32 %v857, %v646
      %v862 = vmul.f32 %v858, %v647
      %v863 = vmul.f32 %v859, %v648
      %v864 = vsel %vm653, %v860, 0.0
      %v865 = vsel %vm653, %v861, 0.0
      %v866 = vadd.f32 %v864, %v865
      %v867 = vsel %vm653, %v862, 0.0
      %v868 = vadd.f32 %v866, %v867
      %v869 = vsel %vm653, %v863, 0.0
      %v870 = vadd.f32 %v868, %v869
      %871 = vadd.xlane.f32.xlu0 %v870
      %v872 = vpop.xlane.xlu0 %871
      %v873 = vmul.f32 %v856, %v628
      %v874 = vmul.f32 %v857, %v632
      %v875 = vmul.f32 %v858, %v636
      %v876 = vmul.f32 %v859, %v640
      %v877 = vsel %vm653, %v873, 0.0
      %v878 = vsel %vm653, %v874, 0.0
      %v879 = vadd.f32 %v877, %v878
      %v880 = vsel %vm653, %v875, 0.0
      %v881 = vadd.f32 %v879, %v880
      %v882 = vsel %vm653, %v876, 0.0
      %v883 = vadd.f32 %v881, %v882
      %884 = vadd.xlane.f32.xlu0 %v883
      %v885 = vpop.xlane.xlu0 %884
      %v886 = vmul.f32 %v852, %v649
      %v887 = vmul.f32 %v853, %v650
      %v888 = vmul.f32 %v854, %v651
      %v889 = vmul.f32 %v855, %v652
      %v890 = vsel %vm653, %v886, 0.0
      %v891 = vsel %vm653, %v887, 0.0
      %v892 = vadd.f32 %v890, %v891
      %v893 = vsel %vm653, %v888, 0.0
      %v894 = vadd.f32 %v892, %v893
      %v895 = vsel %vm653, %v889, 0.0
      %v896 = vadd.f32 %v894, %v895
      %897 = vadd.xlane.f32.xlu0 %v896
      %v898 = vpop.xlane.xlu0 %897
      %v899 = vmul.f32 %v852, %v628
      %v900 = vmul.f32 %v853, %v632
      %v901 = vmul.f32 %v854, %v636
      %v902 = vmul.f32 %v855, %v640
      %v903 = vsel %vm653, %v899, 0.0
      %v904 = vsel %vm653, %v900, 0.0
      %v905 = vadd.f32 %v903, %v904
      %v906 = vsel %vm653, %v901, 0.0
      %v907 = vadd.f32 %v905, %v906
      %v908 = vsel %vm653, %v902, 0.0
      %v909 = vadd.f32 %v907, %v908
      %910 = vadd.xlane.f32.xlu0 %v909
      %v911 = vpop.xlane.xlu0 %910
      %v912 = vadd.f32 %v872, %v898
      %v913 = vadd.f32 %v885, %v911
      %v914 = vmul.f32 %v912, 2.0
      %v915 = vadd.f32 %v914, 1e-08
      %v916 = vadd.f32 %v913, %v672
      %v917 = vadd.f32 %v916, 1e-08
      %v918 = vrcp.pop %v917
      %v919 = vmul.f32 1.0, %v918
      %v920 = vmul.f32 %v919, 2.0
      %v921 = vmul.f32 %v915, %v919
      %v922 = vmul.f32 %v921, %v919
      %v923 = vmul.f32 %v922, %v628
      %v924 = vmul.f32 %v922, %v632
      %v925 = vmul.f32 %v922, %v636
      %v926 = vmul.f32 %v922, %v640
      %v927 = vmul.f32 %v920, %v645
      %v928 = vmul.f32 %v920, %v646
      %v929 = vmul.f32 %v920, %v647
      %v930 = vmul.f32 %v920, %v648
      %v931 = vsub.f32 %v923, %v927
      %v932 = vsub.f32 %v924, %v928
      %v933 = vsub.f32 %v925, %v929
      %v934 = vsub.f32 %v926, %v930
      %v935 = vmul.f32 %v920, %v649
      %v936 = vmul.f32 %v920, %v650
      %v937 = vmul.f32 %v920, %v651
      %v938 = vmul.f32 %v920, %v652
      %v939 = vsub.f32 %v923, %v935
      %v940 = vsub.f32 %v924, %v936
      %v941 = vsub.f32 %v925, %v937
      %v942 = vsub.f32 %v926, %v938
      %v943 = vmul.f32 %v931, %v856
      %v944 = vmul.f32 %v932, %v857
      %v945 = vmul.f32 %v933, %v858
      %v946 = vmul.f32 %v934, %v859
      %v947 = vmul.f32 %v939, %v852
      %v948 = vmul.f32 %v940, %v853
      %v949 = vmul.f32 %v941, %v854
      %v950 = vmul.f32 %v942, %v855
      %v951 = vadd.f32 %v943, %v947
      %v952 = vadd.f32 %v944, %v948
      %v953 = vadd.f32 %v945, %v949
      %v954 = vadd.f32 %v946, %v950
      %v955 = vsub.f32 %v931, %v951
      %v956 = vsub.f32 %v932, %v952
      %v957 = vsub.f32 %v933, %v953
      %v958 = vsub.f32 %v934, %v954
      %v959 = vmul.f32 %v856, %v955
      %v960 = vmul.f32 %v857, %v956
      %v961 = vmul.f32 %v858, %v957
      %v962 = vmul.f32 %v859, %v958
      %v963 = vlaneseq
      %v964 = vshrl.u32 %v963, 7
      %v965 = vsub.s32 0, %v964
      %v966 = vrot.slane %v959, %v965
      %v967 = vlaneseq
      %v968 = vshrl.u32 %v967, 7
      %v969 = vsub.s32 0, %v968
      %v970 = vrot.slane %v960, %v969
      %v971 = vlaneseq
      %v972 = vshrl.u32 %v971, 7
      %v973 = vsub.s32 0, %v972
      %v974 = vrot.slane %v961, %v973
      %v975 = vlaneseq
      %v976 = vshrl.u32 %v975, 7
      %v977 = vsub.s32 0, %v976
      %v978 = vrot.slane %v962, %v977
      %v979 = vmul.f32 %v724, %v966
      %v980 = vmul.f32 %v724, %v970
      %v981 = vmul.f32 %v724, %v974
      %v982 = vmul.f32 %v724, %v978
      %v983 = vmul.f32 %v729, %v966
      %v984 = vmul.f32 %v729, %v970
      %v985 = vmul.f32 %v729, %v974
      %v986 = vmul.f32 %v729, %v978
      %v987 = vsub.f32 %v939, %v951
      %v988 = vsub.f32 %v940, %v952
      %v989 = vsub.f32 %v941, %v953
      %v990 = vsub.f32 %v942, %v954
      %v991 = vmul.f32 %v852, %v987
      %v992 = vmul.f32 %v853, %v988
      %v993 = vmul.f32 %v854, %v989
      %v994 = vmul.f32 %v855, %v990
      %v995 = vlaneseq
      %v996 = vshrl.u32 %v995, 7
      %v997 = vsub.s32 0, %v996
      %v998 = vrot.slane %v991, %v997
      %v999 = vlaneseq
      %v1000 = vshrl.u32 %v999, 7
      %v1001 = vsub.s32 0, %v1000
      %v1002 = vrot.slane %v992, %v1001
      %v1003 = vlaneseq
      %v1004 = vshrl.u32 %v1003, 7
      %v1005 = vsub.s32 0, %v1004
      %v1006 = vrot.slane %v993, %v1005
      %v1007 = vlaneseq
      %v1008 = vshrl.u32 %v1007, 7
      %v1009 = vsub.s32 0, %v1008
      %v1010 = vrot.slane %v994, %v1009
      %v1011 = vmul.f32 %v778, %v998
      %v1012 = vmul.f32 %v778, %v1002
      %v1013 = vmul.f32 %v778, %v1006
      %v1014 = vmul.f32 %v778, %v1010
      %v1015 = vmul.f32 %v782, %v998
      %v1016 = vmul.f32 %v782, %v1002
      %v1017 = vmul.f32 %v782, %v1006
      %v1018 = vmul.f32 %v782, %v1010
      %v1019 = vadd.f32 %v979, %v1011
      %v1020 = vadd.f32 %v980, %v1012
      %v1021 = vadd.f32 %v981, %v1013
      %v1022 = vadd.f32 %v982, %v1014
      %v1023 = vadd.f32 %v983, %v1015
      %v1024 = vadd.f32 %v984, %v1016
      %v1025 = vadd.f32 %v985, %v1017
      %v1026 = vadd.f32 %v986, %v1018
      %v1027 = vmul.f32 %v1019, %v1019
      %v1028 = vmul.f32 %v1020, %v1020
      %v1029 = vmul.f32 %v1023, %v1023
      %v1030 = vmul.f32 %v1024, %v1024
      %v1031 = vadd.f32 %v1027, %v1028
      %1032 = vadd.xlane.f32.xlu0 %v1031
      %v1033 = vpop.xlane.xlu0 %1032
      %v1034 = vadd.f32 %v1029, %v1030
      %1035 = vadd.xlane.f32.xlu0 %v1034
      %v1036 = vpop.xlane.xlu0 %1035
      %v1037 = vadd.f32 %v1033, %v1036
      %v1038 = vrot.slane %v1037, 4
      %v1039 = vadd.f32 %v1037, %v1038
      %v1040 = vrot.slane %v1039, 2
      %v1041 = vadd.f32 %v1039, %v1040
      %v1042 = vrot.slane %v1041, 1
      %v1043 = vadd.f32 %v1041, %v1042
      %v1044 = vrsqrt.pop %v1043
      %v1045 = vmul.f32 %v1043, %v1044
      %vm1046 = vcmp.eq.f32.partialorder %v1043, inf
      %v1047 = vsel %vm1046, %v1043, %v1045
      %vm1048 = vcmp.eq.f32.partialorder %v1043, 0.0
      %v1049 = vand.u32 %v1043, 2147483648
      %v1050 = vsel %vm1048, %v1049, %v1047
      %v1051 = vadd.f32 %v1050, 1e-08
      %v1052 = vrcp.pop %v1051
      %v1053 = vmul.f32 1.0, %v1052
      %v1054 = vmul.f32 %v1019, %v1053
      %v1055 = vmul.f32 %v1020, %v1053
      %v1056 = vmul.f32 %v1023, %v1053
      %v1057 = vmul.f32 %v1024, %v1053
      %1058 = vst [vmem:[#allocation2] sm:$0xff] %v1054
      %1059 = vst [vmem:[#allocation2 + $0x8] sm:$0xff] %v1055
      %1060 = vst [vmem:[#allocation2 + $0x20] sm:$0xff] %v1056
      %1061 = vst [vmem:[#allocation2 + $0x28] sm:$0xff] %v1057
      %v1062 = vmul.f32 %v1021, %v1021
      %v1063 = vmul.f32 %v1022, %v1022
      %v1064 = vmul.f32 %v1025, %v1025
      %v1065 = vmul.f32 %v1026, %v1026
      %v1066 = vadd.f32 %v1062, %v1063
      %1067 = vadd.xlane.f32.xlu0 %v1066
      %v1068 = vpop.xlane.xlu0 %1067
      %v1069 = vadd.f32 %v1064, %v1065
      %1070 = vadd.xlane.f32.xlu0 %v1069
      %v1071 = vpop.xlane.xlu0 %1070
      %v1072 = vadd.f32 %v1068, %v1071
      %v1073 = vrot.slane %v1072, 4
      %v1074 = vadd.f32 %v1072, %v1073
      %v1075 = vrot.slane %v1074, 2
      %v1076 = vadd.f32 %v1074, %v1075
      %v1077 = vrot.slane %v1076, 1
      %v1078 = vadd.f32 %v1076, %v1077
      %v1079 = vrsqrt.pop %v1078
      %v1080 = vmul.f32 %v1078, %v1079
      %vm1081 = vcmp.eq.f32.partialorder %v1078, inf
      %v1082 = vsel %vm1081, %v1078, %v1080
      %vm1083 = vcmp.eq.f32.partialorder %v1078, 0.0
      %v1084 = vand.u32 %v1078, 2147483648
      %v1085 = vsel %vm1083, %v1084, %v1082
      %v1086 = vadd.f32 %v1085, 1e-08
      %v1087 = vrcp.pop %v1086
      %v1088 = vmul.f32 1.0, %v1087
      %v1089 = vmul.f32 %v1021, %v1088
      %v1090 = vmul.f32 %v1022, %v1088
      %v1091 = vmul.f32 %v1025, %v1088
      %v1092 = vmul.f32 %v1026, %v1088
      %1093 = vst [vmem:[#allocation2 + $0x10] sm:$0xff] %v1089
      %1094 = vst [vmem:[#allocation2 + $0x18] sm:$0xff] %v1090
      %1095 = vst [vmem:[#allocation2 + $0x30] sm:$0xff] %v1091
      %1096 = vst [vmem:[#allocation2 + $0x38] sm:$0xff] %v1092
      %v1097 = vld [vmem:[%s7] sm:$0xff]
      %v1098 = vld [vmem:[%s7 + $0x8] sm:$0xff]
      %v1099 = vld [vmem:[%s7 + $0x10] sm:$0xff]
      %v1100 = vld [vmem:[%s7 + $0x18] sm:$0xff]
      %v1101 = vld [vmem:[%s7 + $0x20] sm:$0xff]
      %v1102 = vld [vmem:[%s7 + $0x28] sm:$0xff]
      %v1103 = vld [vmem:[%s7 + $0x30] sm:$0xff]
      %v1104 = vld [vmem:[%s7 + $0x38] sm:$0xff]
      %v1105 = vld [vmem:[#allocation2] sm:$0xff]
      %v1106 = vld [vmem:[#allocation2 + $0x8] sm:$0xff]
      %v1107 = vld [vmem:[#allocation2 + $0x10] sm:$0xff]
      %v1108 = vld [vmem:[#allocation2 + $0x18] sm:$0xff]
      %v1109 = vld [vmem:[#allocation2 + $0x20] sm:$0xff]
      %v1110 = vld [vmem:[#allocation2 + $0x28] sm:$0xff]
      %v1111 = vld [vmem:[#allocation2 + $0x30] sm:$0xff]
      %v1112 = vld [vmem:[#allocation2 + $0x38] sm:$0xff]
      %v1113 = vmul.f32 %v1105, 6.0
      %v1114 = vmul.f32 %v1106, 6.0
      %v1115 = vmul.f32 %v1107, 6.0
      %v1116 = vmul.f32 %v1108, 6.0
      %v1117 = vmul.f32 %v1109, 6.0
      %v1118 = vmul.f32 %v1110, 6.0
      %v1119 = vmul.f32 %v1111, 6.0
      %v1120 = vmul.f32 %v1112, 6.0
      %v1121 = vadd.f32 %v1097, %v1113
      %v1122 = vadd.f32 %v1098, %v1114
      %v1123 = vadd.f32 %v1099, %v1115
      %v1124 = vadd.f32 %v1100, %v1116
      %v1125 = vadd.f32 %v1101, %v1117
      %v1126 = vadd.f32 %v1102, %v1118
      %v1127 = vadd.f32 %v1103, %v1119
      %v1128 = vadd.f32 %v1104, %v1120
      %v1129 = vmul.f32 %v1121, %v724
      %v1130 = vmul.f32 %v1122, %v724
      %v1131 = vmul.f32 %v1123, %v724
      %v1132 = vmul.f32 %v1124, %v724
      %v1133 = vmul.f32 %v1125, %v729
      %v1134 = vmul.f32 %v1126, %v729
      %v1135 = vmul.f32 %v1127, %v729
      %v1136 = vmul.f32 %v1128, %v729
      %v1137 = vadd.f32 %v1129, %v1133
      %v1138 = vrot.slane %v1137, 4
      %v1139 = vadd.f32 %v1137, %v1138
      %v1140 = vrot.slane %v1139, 2
      %v1141 = vadd.f32 %v1139, %v1140
      %v1142 = vrot.slane %v1141, 1
      %v1143 = vadd.f32 %v1141, %v1142
      %v1144 = vadd.f32 %v1130, %v1134
      %v1145 = vrot.slane %v1144, 4
      %v1146 = vadd.f32 %v1144, %v1145
      %v1147 = vrot.slane %v1146, 2
      %v1148 = vadd.f32 %v1146, %v1147
      %v1149 = vrot.slane %v1148, 1
      %v1150 = vadd.f32 %v1148, %v1149
      %v1151 = vadd.f32 %v1131, %v1135
      %v1152 = vrot.slane %v1151, 4
      %v1153 = vadd.f32 %v1151, %v1152
      %v1154 = vrot.slane %v1153, 2
      %v1155 = vadd.f32 %v1153, %v1154
      %v1156 = vrot.slane %v1155, 1
      %v1157 = vadd.f32 %v1155, %v1156
      %v1158 = vadd.f32 %v1132, %v1136
      %v1159 = vrot.slane %v1158, 4
      %v1160 = vadd.f32 %v1158, %v1159
      %v1161 = vrot.slane %v1160, 2
      %v1162 = vadd.f32 %v1160, %v1161
      %v1163 = vrot.slane %v1162, 1
      %v1164 = vadd.f32 %v1162, %v1163
      %v1165 = vadd.f32 %v1143, %v770
      %v1166 = vadd.f32 %v1150, %v770
      %v1167 = vadd.f32 %v1157, %v770
      %v1168 = vadd.f32 %v1164, %v770
      %v1169 = vmul.f32 %v1121, %v778
      %v1170 = vmul.f32 %v1122, %v778
      %v1171 = vmul.f32 %v1123, %v778
      %v1172 = vmul.f32 %v1124, %v778
      %v1173 = vmul.f32 %v1125, %v782
      %v1174 = vmul.f32 %v1126, %v782
      %v1175 = vmul.f32 %v1127, %v782
      %v1176 = vmul.f32 %v1128, %v782
      %v1177 = vadd.f32 %v1169, %v1173
      %v1178 = vrot.slane %v1177, 4
      %v1179 = vadd.f32 %v1177, %v1178
      %v1180 = vrot.slane %v1179, 2
      %v1181 = vadd.f32 %v1179, %v1180
      %v1182 = vrot.slane %v1181, 1
      %v1183 = vadd.f32 %v1181, %v1182
      %v1184 = vadd.f32 %v1170, %v1174
      %v1185 = vrot.slane %v1184, 4
      %v1186 = vadd.f32 %v1184, %v1185
      %v1187 = vrot.slane %v1186, 2
      %v1188 = vadd.f32 %v1186, %v1187
      %v1189 = vrot.slane %v1188, 1
      %v1190 = vadd.f32 %v1188, %v1189
      %v1191 = vadd.f32 %v1171, %v1175
      %v1192 = vrot.slane %v1191, 4
      %v1193 = vadd.f32 %v1191, %v1192
      %v1194 = vrot.slane %v1193, 2
      %v1195 = vadd.f32 %v1193, %v1194
      %v1196 = vrot.slane %v1195, 1
      %v1197 = vadd.f32 %v1195, %v1196
      %v1198 = vadd.f32 %v1172, %v1176
      %v1199 = vrot.slane %v1198, 4
      %v1200 = vadd.f32 %v1198, %v1199
      %v1201 = vrot.slane %v1200, 2
      %v1202 = vadd.f32 %v1200, %v1201
      %v1203 = vrot.slane %v1202, 1
      %v1204 = vadd.f32 %v1202, %v1203
      %v1205 = vadd.f32 %v1183, %v770
      %v1206 = vadd.f32 %v1190, %v770
      %v1207 = vadd.f32 %v1197, %v770
      %v1208 = vadd.f32 %v1204, %v770
      %v1213 = vrot.slane %v1205, 1
      %v1214 = vrot.slane %v1206, 1
      %v1215 = vrot.slane %v1207, 1
      %v1216 = vrot.slane %v1208, 1
      %v1221 = vsub.f32 %v1165, %v1213
      %v1222 = vsub.f32 %v1166, %v1214
      %v1223 = vsub.f32 %v1167, %v1215
      %v1224 = vsub.f32 %v1168, %v1216
      %v1225 = vmul.f32 %v1221, 1.442695
      %v1226 = vpow.pop %v1225
      %v1227 = vmul.f32 %v1222, 1.442695
      %v1228 = vpow.pop %v1227
      %v1229 = vmul.f32 %v1223, 1.442695
      %v1230 = vpow.pop %v1229
      %v1231 = vmul.f32 %v1224, 1.442695
      %v1232 = vpow.pop %v1231
      %v1233 = vadd.f32 %v1226, 1.0
      %v1234 = vadd.f32 %v1228, 1.0
      %v1235 = vadd.f32 %v1230, 1.0
      %v1236 = vadd.f32 %v1232, 1.0
      %v1237 = vrcp.pop %v1233
      %v1238 = vmul.f32 1.0, %v1237
      %v1239 = vrcp.pop %v1234
      %v1240 = vmul.f32 1.0, %v1239
      %v1241 = vrcp.pop %v1235
      %v1242 = vmul.f32 1.0, %v1241
      %v1243 = vrcp.pop %v1236
      %v1244 = vmul.f32 1.0, %v1243
      %v1245 = vsub.f32 1.0, %v1238
      %v1246 = vsub.f32 1.0, %v1240
      %v1247 = vsub.f32 1.0, %v1242
      %v1248 = vsub.f32 1.0, %v1244
      %v1249 = vmul.f32 %v1245, %v645
      %v1250 = vmul.f32 %v1246, %v646
      %v1251 = vmul.f32 %v1247, %v647
      %v1252 = vmul.f32 %v1248, %v648
      %v1253 = vsel %vm653, %v1249, 0.0
      %v1254 = vsel %vm653, %v1250, 0.0
      %v1255 = vadd.f32 %v1253, %v1254
      %v1256 = vsel %vm653, %v1251, 0.0
      %v1257 = vadd.f32 %v1255, %v1256
      %v1258 = vsel %vm653, %v1252, 0.0
      %v1259 = vadd.f32 %v1257, %v1258
      %1260 = vadd.xlane.f32.xlu0 %v1259
      %v1261 = vpop.xlane.xlu0 %1260
      %v1262 = vmul.f32 %v1245, %v628
      %v1263 = vmul.f32 %v1246, %v632
      %v1264 = vmul.f32 %v1247, %v636
      %v1265 = vmul.f32 %v1248, %v640
      %v1266 = vsel %vm653, %v1262, 0.0
      %v1267 = vsel %vm653, %v1263, 0.0
      %v1268 = vadd.f32 %v1266, %v1267
      %v1269 = vsel %vm653, %v1264, 0.0
      %v1270 = vadd.f32 %v1268, %v1269
      %v1271 = vsel %vm653, %v1265, 0.0
      %v1272 = vadd.f32 %v1270, %v1271
      %1273 = vadd.xlane.f32.xlu0 %v1272
      %v1274 = vpop.xlane.xlu0 %1273
      %v1275 = vmul.f32 %v1238, %v649
      %v1276 = vmul.f32 %v1240, %v650
      %v1277 = vmul.f32 %v1242, %v651
      %v1278 = vmul.f32 %v1244, %v652
      %v1279 = vsel %vm653, %v1275, 0.0
      %v1280 = vsel %vm653, %v1276, 0.0
      %v1281 = vadd.f32 %v1279, %v1280
      %v1282 = vsel %vm653, %v1277, 0.0
      %v1283 = vadd.f32 %v1281, %v1282
      %v1284 = vsel %vm653, %v1278, 0.0
      %v1285 = vadd.f32 %v1283, %v1284
      %1286 = vadd.xlane.f32.xlu0 %v1285
      %v1287 = vpop.xlane.xlu0 %1286
      %v1288 = vmul.f32 %v1238, %v628
      %v1289 = vmul.f32 %v1240, %v632
      %v1290 = vmul.f32 %v1242, %v636
      %v1291 = vmul.f32 %v1244, %v640
      %v1292 = vsel %vm653, %v1288, 0.0
      %v1293 = vsel %vm653, %v1289, 0.0
      %v1294 = vadd.f32 %v1292, %v1293
      %v1295 = vsel %vm653, %v1290, 0.0
      %v1296 = vadd.f32 %v1294, %v1295
      %v1297 = vsel %vm653, %v1291, 0.0
      %v1298 = vadd.f32 %v1296, %v1297
      %1299 = vadd.xlane.f32.xlu0 %v1298
      %v1300 = vpop.xlane.xlu0 %1299
      %v1301 = vadd.f32 %v1261, %v1287
      %v1302 = vadd.f32 %v1274, %v1300
      %v1303 = vmul.f32 %v1301, 2.0
      %v1304 = vadd.f32 %v1303, 1e-08
      %v1305 = vadd.f32 %v1302, %v672
      %v1306 = vadd.f32 %v1305, 1e-08
      %v1307 = vrcp.pop %v1306
      %v1308 = vmul.f32 %v1304, %v1307
      %v1309 = vsub.f32 1.0, %v1308
      %v1310 = vlaneseq
      %v1311 = vshrl.u32 %v1310, 7
      %v1312 = vsub.s32 0, %v1311
      %v1313 = vrot.slane %v1309, %v1312
      %v1314 = vadd.f32 %v1313, 0.0
      %1315 = vst [vmem:[%s465] sm:$0xff] %v1314
      %p1316 = scmp.lt.s32.totalorder %s20, 1
      %s1317 = scalar_select %p1316, %s20, 1
      %s1318 = smul.addr %s1317, 8
      %s1319 = scalar_lea.vmem %s9, %s1318
      // Predicated region
      $region57: #{vat3d_v2_feat_forward.3} parent=55 // pred_check
        %p1320 = pneg %p268
      $region58: #{vat3d_v2_feat_forward.3} parent=55 // pred_check_branch
        %1322 = sbr.rel (%p1320) target = $region60
      $region59: #{vat3d_v2_feat_forward.3} parent=55 // pred_region
        _
      $region60: #{vat3d_v2_feat_forward.3} parent=55 // pred_fallthru
        _
    $region56: #{vat3d_v2_feat_forward.3} parent=5 // pred_fallthru
      _
    %p1323 = scmp.le.s32.totalorder 2, %s15
    // Predicated region
    $region61: #{vat3d_v2_feat_forward.3} parent=5 // pred_check
      %p1324 = pneg %p1323
    $region62: #{vat3d_v2_feat_forward.3} parent=5 // pred_check_branch
      %1326 = sbr.rel (%p1324) target = $region64
    $region63: #{vat3d_v2_feat_forward.3} parent=5 // pred_region
      %s1327 = ssub.s32 %s15, 2
      // Predicated region
      $region65: #{vat3d_v2_feat_forward.3} parent=63 // pred_check
        %p1328 = pneg %p274
      $region66: #{vat3d_v2_feat_forward.3} parent=63 // pred_check_branch
        %1330 = sbr.rel (%p1328) target = $region68
      $region67: #{vat3d_v2_feat_forward.3} parent=63 // pred_region
        %p1331 = scmp.lt.s32.totalorder %s21, 1
        %s1332 = scalar_select %p1331, %s21, 1
        %s1333 = smul.addr %s1332, 8
        %s1334 = scalar_lea.vmem %s9, %s1333
      $region68: #{vat3d_v2_feat_forward.3} parent=63 // pred_fallthru
        _
    $region64: #{vat3d_v2_feat_forward.3} parent=5 // pred_fallthru
      _
  $region6: #{vat3d_v2_feat_forward.3} parent=0 // loop_footer
    %s19 = sadd.s32 1, %s15
  $region7: #{vat3d_v2_feat_forward.3} parent=0 // loop_footer_branch
    %14 = sbr.rel target = $region3
  $region8: #{vat3d_v2_feat_forward.3} parent=0 // loop_exit
    _

</llo_original>
